<compile_context>
chip_gen: v7x
topology: tpu7x:2x2x1
jax: 0.10.0
libtpu: 0.0.40
codegen_flags: <defaults>
</compile_context>

<pallas_src>
import jax
import jax.numpy as jnp
from jax.experimental import pallas as pl
from jax.experimental.pallas import tpu as pltpu

# ---------------- model dimensions (small, synthetic) ----------------
FEAT_DIM = 96
N_BOXES = 8
BOX_DIM = 4
BOX_FLAT = N_BOXES * BOX_DIM              # 32
INPUT_DIM = FEAT_DIM + BOX_FLAT           # 128 (exactly one lane width)
HIDDEN1 = 512
HIDDEN2 = 256
ACTION_DIM = 8
HEAD_PAD = 128                            # lane-padded fused head width
BATCH = 8
LN_EPS = 1e-5

# Tile cap: per-step batch-dependent VMEM at 1024 rows is ~8 MiB
# (x + out double-buffered, f32/bf16 intermediates) + ~0.45 MiB of weights,
# which fits the v5e 16 MiB default scoped limit and v7x's 64 MiB physical
# VMEM without touching vmem_limit_bytes.
MAX_TILE_ROWS = 1024


# ----------------------------- kernel ---------------------------------
def dueling_dqn_kernel(x_ref, w1_ref, b1_ref, w2_ref, b2_ref,
                       wq_ref, bq_ref, out_ref):
    x = x_ref[...]                                        # (TB, 128) f32

    # LayerNorm statistics: var = E[x^2] - mu^2 (two independent reductions).
    inv_d = 1.0 / INPUT_DIM
    mu = jnp.sum(x, axis=-1, keepdims=True) * inv_d
    ex2 = jnp.sum(x * x, axis=-1, keepdims=True) * inv_d
    var = ex2 - mu * mu
    xn = (x - mu) * jax.lax.rsqrt(var + LN_EPS)           # affine folded into w1/b1

    # Shared MLP: bf16 matmul inputs, f32 MXU accumulation.
    h1 = jnp.dot(xn.astype(jnp.bfloat16), w1_ref[...],
                 preferred_element_type=jnp.float32) + b1_ref[...]
    h1 = jnp.maximum(h1, 0.0)
    h2 = jnp.dot(h1.astype(jnp.bfloat16), w2_ref[...],
                 preferred_element_type=jnp.float32) + b2_ref[...]
    h2 = jnp.maximum(h2, 0.0)

    # Dueling combine is folded into wq/bq: this matmul emits Q directly
    # (columns >= ACTION_DIM are zero padding for a dense 128-lane store).
    out_ref[...] = jnp.dot(h2.astype(jnp.bfloat16), wq_ref[...],
                           preferred_element_type=jnp.float32) + bq_ref[...]


# --------------------------- tiling policy ------------------------------
def _round_up(x, m):
    return ((x + m - 1) // m) * m


def _pick_batch_tile(b):
    b8 = _round_up(b, 8)                   # (8,128) sublane layout requirement
    if b8 <= 512:
        return b8                          # single step; launch overhead dominates
    # Large batches: big tiles amortize the ~0.35us/step grid overhead; keep
    # >= 2 steps so both v7x TensorCores get work; cap at MAX_TILE_ROWS so the
    # per-step VMEM stays under every generation's default scoped limit.
    return min(MAX_TILE_ROWS, _round_up(pl.cdiv(b8, 2), 256))


def _build_forward(b_pad, tile_b, buffered_weights):
    batch_map = lambda i: (i, 0)   # batch-tiled operands
    const_map = lambda i: (0, 0)   # weights/biases: VMEM-resident across tiles

    def const_spec(shape):
        if buffered_weights:
            # Constant block -> single buffer; halves weight VMEM footprint.
            return pl.BlockSpec(shape, const_map, pipeline_mode=pl.Buffered(1))
        return pl.BlockSpec(shape, const_map)

    in_specs = [
        pl.BlockSpec((tile_b, INPUT_DIM), batch_map),   # x
        const_spec((INPUT_DIM, HIDDEN1)),               # w1 (bf16, LN-folded)
        const_spec((1, HIDDEN1)),                       # b1 (f32, LN-folded)
        const_spec((HIDDEN1, HIDDEN2)),                 # w2 (bf16)
        const_spec((1, HIDDEN2)),                       # b2 (f32)
        const_spec((HIDDEN2, HEAD_PAD)),                # fused+folded head w (bf16)
        const_spec((1, HEAD_PAD)),                      # fused+folded head b (f32)
    ]
    out_specs = pl.BlockSpec((tile_b, HEAD_PAD), batch_map)

    return pl.pallas_call(
        dueling_dqn_kernel,
        out_shape=jax.ShapeDtypeStruct((b_pad, HEAD_PAD), jnp.float32),
        grid=(b_pad // tile_b,),
        in_specs=in_specs,
        out_specs=out_specs,
        compiler_params=pltpu.CompilerParams(
            dimension_semantics=("parallel",)),
    )


def dueling_dqn_forward(feat, boxes, params):
    b = feat.shape[0]
    # One-time wrapper concat -> a single dense 128-lane f32 input stream.
    x = jnp.concatenate(
        [feat.astype(jnp.float32),
         boxes.reshape(b, BOX_FLAT).astype(jnp.float32)], axis=1)

    tile_b = _pick_batch_tile(b)
    b_pad = _round_up(b, tile_b)
    if b_pad != b:
        x = jnp.pad(x, ((0, b_pad - b), (0, 0)))   # zero rows are LN-safe

    args = (x, params["w1p"], params["b1p"], params["w2p"], params["b2p"],
            params["wqp"], params["bqp"])
    try:
        q_pad = _build_forward(b_pad, tile_b, buffered_weights=True)(*args)
    except Exception:
        # Fallback for jax versions without BlockSpec(pipeline_mode=...);
        # the only delta is the single-buffering hint on the weights.
        q_pad = _build_forward(b_pad, tile_b, buffered_weights=False)(*args)

    return q_pad[:b, :ACTION_DIM]


# ------------------------------ params ----------------------------------
def init_params(key):
    ks = jax.random.split(key, 8)

    def lin(kw, kb, fan_in, fan_out):
        # uniform(-1/sqrt(fan_in), 1/sqrt(fan_in)), like nn.Linear default
        bound = 1.0 / jnp.sqrt(jnp.float32(fan_in))
        w = jax.random.uniform(kw, (fan_in, fan_out), jnp.float32, -bound, bound)
        bvec = jax.random.uniform(kb, (1, fan_out), jnp.float32, -bound, bound)
        return w, bvec

    w1, b1 = lin(ks[0], ks[1], INPUT_DIM, HIDDEN1)
    w2, b2 = lin(ks[2], ks[3], HIDDEN1, HIDDEN2)
    wv, bv = lin(ks[4], ks[5], HIDDEN2, 1)
    wa, ba = lin(ks[6], ks[7], HIDDEN2, ACTION_DIM)
    gamma = jnp.ones((1, INPUT_DIM), jnp.float32)
    beta = jnp.zeros((1, INPUT_DIM), jnp.float32)

    # ---- fold LayerNorm affine into the first linear (f32 algebra) ----
    w1f = gamma.reshape(INPUT_DIM, 1) * w1            # diag(gamma) @ w1
    b1f = beta @ w1 + b1

    # ---- fold dueling combine into a single head: Q = h @ w_q + b_q ----
    # Q = V * 1 + A - mean(A)  ==  h @ (wv @ 1(1,A) + wa @ M) + (bv @ 1 + ba @ M)
    # with M = I_A - J_A / A (exactly linear, folded in f32).
    ones_row = jnp.ones((1, ACTION_DIM), jnp.float32)
    M = jnp.eye(ACTION_DIM, dtype=jnp.float32) - jnp.full(
        (ACTION_DIM, ACTION_DIM), 1.0 / ACTION_DIM, jnp.float32)
    w_q = wv @ ones_row + wa @ M                      # (HIDDEN2, ACTION_DIM)
    b_q = bv @ ones_row + ba @ M                      # (1, ACTION_DIM)

    # ---- pad the fused head to a dense 128-lane layout (zero columns) ----
    w_q_pad = jnp.zeros((HIDDEN2, HEAD_PAD), jnp.float32).at[:, :ACTION_DIM].set(w_q)
    b_q_pad = jnp.zeros((1, HEAD_PAD), jnp.float32).at[:, :ACTION_DIM].set(b_q)

    return {
        # --- kernel inputs (weights bf16, biases f32) ---
        "w1p": w1f.astype(jnp.bfloat16), "b1p": b1f,
        "w2p": w2.astype(jnp.bfloat16),  "b2p": b2,
        "wqp": w_q_pad.astype(jnp.bfloat16), "bqp": b_q_pad,
        # --- raw params (for the original-module-semantics reference) ---
        "w1": w1, "b1": b1, "w2": w2, "b2": b2,
        "wv": wv, "bv": bv, "wa": wa, "ba": ba,
        "gamma": gamma, "beta": beta,
    }


# --------------------------- references ----------------------------------
def reference_forward_raw(feat, boxes, p):
    """Original PyTorch-module semantics, pure float32, no folds/bf16."""
    b = feat.shape[0]
    x = jnp.concatenate(
        [feat.astype(jnp.float32), boxes.reshape(b, -1).astype(jnp.float32)], axis=1)
    mu = jnp.mean(x, axis=-1, keepdims=True)
    var = jnp.mean((x - mu) ** 2, axis=-1, keepdims=True)
    xn = (x - mu) / jnp.sqrt(var + LN_EPS) * p["gamma"] + p["beta"]
    h = jnp.maximum(xn @ p["w1"] + p["b1"], 0.0)
    h = jnp.maximum(h @ p["w2"] + p["b2"], 0.0)
    V = h @ p["wv"] + p["bv"]
    A = h @ p["wa"] + p["ba"]
    return V + (A - jnp.mean(A, axis=1, keepdims=True))


def reference_forward_mirror(feat, boxes, p):
    """Mirrors kernel numerics exactly (folded bf16 weights, f32 accumulation)."""
    b = feat.shape[0]
    x = jnp.concatenate(
        [feat.astype(jnp.float32), boxes.reshape(b, -1).astype(jnp.float32)], axis=1)
    mu = jnp.mean(x, axis=-1, keepdims=True)
    ex2 = jnp.mean(x * x, axis=-1, keepdims=True)
    xn = (x - mu) * jax.lax.rsqrt(ex2 - mu * mu + LN_EPS)
    h = jnp.maximum(jnp.dot(xn.astype(jnp.bfloat16), p["w1p"],
                            preferred_element_type=jnp.float32) + p["b1p"], 0.0)
    h = jnp.maximum(jnp.dot(h.astype(jnp.bfloat16), p["w2p"],
                            preferred_element_type=jnp.float32) + p["b2p"], 0.0)
    q = jnp.dot(h.astype(jnp.bfloat16), p["wqp"],
                preferred_element_type=jnp.float32) + p["bqp"]
    return q[:, :ACTION_DIM]


# ------------------------------- main ------------------------------------
if __name__ == "__main__":
    key = jax.random.PRNGKey(0)
    k_feat, k_boxes, k_params, k_feat2, k_boxes2 = jax.random.split(key, 5)
    params = init_params(k_params)

    feat = jax.random.normal(k_feat, (BATCH, FEAT_DIM), jnp.float32)
    boxes = jax.random.normal(k_boxes, (BATCH, N_BOXES, BOX_DIM), jnp.float32)

    q = jax.block_until_ready(dueling_dqn_forward(feat, boxes, params))
    assert q.shape == (BATCH, ACTION_DIM)
    assert jnp.allclose(q, reference_forward_mirror(feat, boxes, params),
                        atol=2e-2, rtol=2e-2), "mismatch vs bf16-mirrored reference"
    assert jnp.allclose(q, reference_forward_raw(feat, boxes, params),
                        atol=5e-2, rtol=5e-2), "mismatch vs original f32 semantics"

    # Ragged batch exercises the pad-to-tile path (no whole-batch fallback).
    b2 = 50
    feat2 = jax.random.normal(k_feat2, (b2, FEAT_DIM), jnp.float32)
    boxes2 = jax.random.normal(k_boxes2, (b2, N_BOXES, BOX_DIM), jnp.float32)
    q2 = jax.block_until_ready(dueling_dqn_forward(feat2, boxes2, params))
    assert q2.shape == (b2, ACTION_DIM)
    assert jnp.allclose(q2, reference_forward_mirror(feat2, boxes2, params),
                        atol=2e-2, rtol=2e-2), "ragged-batch mismatch"

    print("KERNEL_OK")
</pallas_src>

<mosaic_0001>
module attributes {stable_mosaic.version = 11 : i64} {
  func.func @dueling_dqn_kernel(%arg0: i32, %arg1: memref<8x128xf32, #tpu.memory_space<vmem>>, %arg2: memref<128x512xbf16, #tpu.memory_space<vmem>>, %arg3: memref<1x512xf32, #tpu.memory_space<vmem>>, %arg4: memref<512x256xbf16, #tpu.memory_space<vmem>>, %arg5: memref<1x256xf32, #tpu.memory_space<vmem>>, %arg6: memref<256x128xbf16, #tpu.memory_space<vmem>>, %arg7: memref<1x128xf32, #tpu.memory_space<vmem>>, %arg8: memref<8x128xf32, #tpu.memory_space<vmem>>) attributes {dimension_semantics = [#tpu.dimension_semantics<parallel>], iteration_bounds = array<i64: 1>, scalar_prefetch = 0 : i64, scratch_operands = 0 : i64, tpu.core_type = #tpu.core_type<tc>, window_params = [{transform_indices = @transform_0, window_bounds = array<i64: 8, 128>}, {pipeline_mode = #tpu.pipeline_mode<synchronous>, transform_indices = @transform_1, window_bounds = array<i64: 128, 512>}, {pipeline_mode = #tpu.pipeline_mode<synchronous>, transform_indices = @transform_2, window_bounds = array<i64: 1, 512>}, {pipeline_mode = #tpu.pipeline_mode<synchronous>, transform_indices = @transform_3, window_bounds = array<i64: 512, 256>}, {pipeline_mode = #tpu.pipeline_mode<synchronous>, transform_indices = @transform_4, window_bounds = array<i64: 1, 256>}, {pipeline_mode = #tpu.pipeline_mode<synchronous>, transform_indices = @transform_5, window_bounds = array<i64: 256, 128>}, {pipeline_mode = #tpu.pipeline_mode<synchronous>, transform_indices = @transform_6, window_bounds = array<i64: 1, 128>}, {transform_indices = @transform_7, window_bounds = array<i64: 8, 128>}]} {
    %c0 = arith.constant 0 : index
    %c0_0 = arith.constant 0 : index
    %0 = vector.load %arg1[%c0, %c0_0] : memref<8x128xf32, #tpu.memory_space<vmem>>, vector<8x128xf32>
    %cst = arith.constant dense<0.000000e+00> : vector<8xf32>
    %1 = vector.multi_reduction <add>, %0, %cst [1] : vector<8x128xf32> to vector<8xf32>
    %2 = vector.shape_cast %1 : vector<8xf32> to vector<8x1xf32>
    %cst_1 = arith.constant 7.812500e-03 : f32
    %3 = vector.broadcast %cst_1 : f32 to vector<8x1xf32>
    %4 = arith.mulf %2, %3 : vector<8x1xf32>
    %5 = arith.mulf %0, %0 : vector<8x128xf32>
    %cst_2 = arith.constant dense<0.000000e+00> : vector<8xf32>
    %6 = vector.multi_reduction <add>, %5, %cst_2 [1] : vector<8x128xf32> to vector<8xf32>
    %7 = vector.shape_cast %6 : vector<8xf32> to vector<8x1xf32>
    %cst_3 = arith.constant 7.812500e-03 : f32
    %8 = vector.broadcast %cst_3 : f32 to vector<8x1xf32>
    %9 = arith.mulf %7, %8 : vector<8x1xf32>
    %10 = arith.mulf %4, %4 : vector<8x1xf32>
    %11 = arith.subf %9, %10 : vector<8x1xf32>
    %12 = vector.broadcast %4 : vector<8x1xf32> to vector<8x128xf32>
    %13 = arith.subf %0, %12 : vector<8x128xf32>
    %cst_4 = arith.constant 9.99999974E-6 : f32
    %14 = vector.broadcast %cst_4 : f32 to vector<8x1xf32>
    %15 = arith.addf %11, %14 : vector<8x1xf32>
    %16 = math.rsqrt %15 : vector<8x1xf32>
    %17 = vector.broadcast %16 : vector<8x1xf32> to vector<8x128xf32>
    %18 = arith.mulf %13, %17 : vector<8x128xf32>
    %19 = arith.truncf %18 : vector<8x128xf32> to vector<8x128xbf16>
    %c0_5 = arith.constant 0 : index
    %c0_6 = arith.constant 0 : index
    %20 = vector.load %arg2[%c0_5, %c0_6] : memref<128x512xbf16, #tpu.memory_space<vmem>>, vector<128x512xbf16>
    %cst_7 = arith.constant dense<0.000000e+00> : vector<8x512xf32>
    %21 = tpu.matmul %19, %20, %cst_7 {dimension_numbers = #tpu.dot_dimension_numbers<[1], [0], [0], [1], [0, 0, 1, 1], [], []>} : vector<8x128xbf16>, vector<128x512xbf16>, vector<8x512xf32> -> vector<8x512xf32>
    %c0_8 = arith.constant 0 : index
    %c0_9 = arith.constant 0 : index
    %22 = vector.load %arg3[%c0_8, %c0_9] : memref<1x512xf32, #tpu.memory_space<vmem>>, vector<1x512xf32>
    %23 = vector.broadcast %22 : vector<1x512xf32> to vector<8x512xf32>
    %24 = arith.addf %21, %23 : vector<8x512xf32>
    %cst_10 = arith.constant 0.000000e+00 : f32
    %25 = vector.broadcast %cst_10 : f32 to vector<8x512xf32>
    %26 = arith.maximumf %24, %25 : vector<8x512xf32>
    %27 = arith.truncf %26 : vector<8x512xf32> to vector<8x512xbf16>
    %c0_11 = arith.constant 0 : index
    %c0_12 = arith.constant 0 : index
    %28 = vector.load %arg4[%c0_11, %c0_12] : memref<512x256xbf16, #tpu.memory_space<vmem>>, vector<512x256xbf16>
    %cst_13 = arith.constant dense<0.000000e+00> : vector<8x256xf32>
    %29 = tpu.matmul %27, %28, %cst_13 {dimension_numbers = #tpu.dot_dimension_numbers<[1], [0], [0], [1], [0, 0, 1, 1], [], []>} : vector<8x512xbf16>, vector<512x256xbf16>, vector<8x256xf32> -> vector<8x256xf32>
    %c0_14 = arith.constant 0 : index
    %c0_15 = arith.constant 0 : index
    %30 = vector.load %arg5[%c0_14, %c0_15] : memref<1x256xf32, #tpu.memory_space<vmem>>, vector<1x256xf32>
    %31 = vector.broadcast %30 : vector<1x256xf32> to vector<8x256xf32>
    %32 = arith.addf %29, %31 : vector<8x256xf32>
    %cst_16 = arith.constant 0.000000e+00 : f32
    %33 = vector.broadcast %cst_16 : f32 to vector<8x256xf32>
    %34 = arith.maximumf %32, %33 : vector<8x256xf32>
    %35 = arith.truncf %34 : vector<8x256xf32> to vector<8x256xbf16>
    %c0_17 = arith.constant 0 : index
    %c0_18 = arith.constant 0 : index
    %36 = vector.load %arg6[%c0_17, %c0_18] : memref<256x128xbf16, #tpu.memory_space<vmem>>, vector<256x128xbf16>
    %cst_19 = arith.constant dense<0.000000e+00> : vector<8x128xf32>
    %37 = tpu.matmul %35, %36, %cst_19 {dimension_numbers = #tpu.dot_dimension_numbers<[1], [0], [0], [1], [0, 0, 1, 1], [], []>} : vector<8x256xbf16>, vector<256x128xbf16>, vector<8x128xf32> -> vector<8x128xf32>
    %c0_20 = arith.constant 0 : index
    %c0_21 = arith.constant 0 : index
    %38 = vector.load %arg7[%c0_20, %c0_21] : memref<1x128xf32, #tpu.memory_space<vmem>>, vector<1x128xf32>
    %39 = vector.broadcast %38 : vector<1x128xf32> to vector<8x128xf32>
    %40 = arith.addf %37, %39 : vector<8x128xf32>
    %c0_22 = arith.constant 0 : index
    %c0_23 = arith.constant 0 : index
    %41 = vector.load %arg8[%c0_22, %c0_23] : memref<8x128xf32, #tpu.memory_space<vmem>>, vector<8x128xf32>
    tpu.vector_store %arg8[%c0_22, %c0_23], %40 {strides = array<i32>} : memref<8x128xf32, #tpu.memory_space<vmem>>, vector<8x128xf32>,
    return
  }
  func.func @transform_0(%arg0: i32) -> (i32, i32) {
    %c0_i32 = arith.constant 0 : i32
    %c0_i32_0 = arith.constant 0 : i32
    return %arg0, %c0_i32 : i32, i32
  }
  func.func @transform_1(%arg0: i32) -> (i32, i32) {
    %c0_i32 = arith.constant 0 : i32
    %c0_i32_0 = arith.constant 0 : i32
    %c0_i32_1 = arith.constant 0 : i32
    return %c0_i32, %c0_i32_0 : i32, i32
  }
  func.func @transform_2(%arg0: i32) -> (i32, i32) {
    %c0_i32 = arith.constant 0 : i32
    %c0_i32_0 = arith.constant 0 : i32
    %c0_i32_1 = arith.constant 0 : i32
    return %c0_i32, %c0_i32_0 : i32, i32
  }
  func.func @transform_3(%arg0: i32) -> (i32, i32) {
    %c0_i32 = arith.constant 0 : i32
    %c0_i32_0 = arith.constant 0 : i32
    %c0_i32_1 = arith.constant 0 : i32
    return %c0_i32, %c0_i32_0 : i32, i32
  }
  func.func @transform_4(%arg0: i32) -> (i32, i32) {
    %c0_i32 = arith.constant 0 : i32
    %c0_i32_0 = arith.constant 0 : i32
    %c0_i32_1 = arith.constant 0 : i32
    return %c0_i32, %c0_i32_0 : i32, i32
  }
  func.func @transform_5(%arg0: i32) -> (i32, i32) {
    %c0_i32 = arith.constant 0 : i32
    %c0_i32_0 = arith.constant 0 : i32
    %c0_i32_1 = arith.constant 0 : i32
    return %c0_i32, %c0_i32_0 : i32, i32
  }
  func.func @transform_6(%arg0: i32) -> (i32, i32) {
    %c0_i32 = arith.constant 0 : i32
    %c0_i32_0 = arith.constant 0 : i32
    %c0_i32_1 = arith.constant 0 : i32
    return %c0_i32, %c0_i32_0 : i32, i32
  }
  func.func @transform_7(%arg0: i32) -> (i32, i32) {
    %c0_i32 = arith.constant 0 : i32
    %c0_i32_0 = arith.constant 0 : i32
    return %arg0, %c0_i32 : i32, i32
  }
}

module attributes {stable_mosaic.version = 11 : i64} {
  func.func @dueling_dqn_kernel(%arg0: i32, %arg1: memref<8x128xf32, #tpu.memory_space<vmem>>, %arg2: memref<128x512xbf16, #tpu.memory_space<vmem>>, %arg3: memref<1x512xf32, #tpu.memory_space<vmem>>, %arg4: memref<512x256xbf16, #tpu.memory_space<vmem>>, %arg5: memref<1x256xf32, #tpu.memory_space<vmem>>, %arg6: memref<256x128xbf16, #tpu.memory_space<vmem>>, %arg7: memref<1x128xf32, #tpu.memory_space<vmem>>, %arg8: memref<8x128xf32, #tpu.memory_space<vmem>>) attributes {dimension_semantics = [#tpu.dimension_semantics<parallel>], iteration_bounds = array<i64: 1>, scalar_prefetch = 0 : i64, scratch_operands = 0 : i64, tpu.core_type = #tpu.core_type<tc>, window_params = [{transform_indices = @transform_0, window_bounds = array<i64: 8, 128>}, {pipeline_mode = #tpu.pipeline_mode<synchronous>, transform_indices = @transform_1, window_bounds = array<i64: 128, 512>}, {pipeline_mode = #tpu.pipeline_mode<synchronous>, transform_indices = @transform_2, window_bounds = array<i64: 1, 512>}, {pipeline_mode = #tpu.pipeline_mode<synchronous>, transform_indices = @transform_3, window_bounds = array<i64: 512, 256>}, {pipeline_mode = #tpu.pipeline_mode<synchronous>, transform_indices = @transform_4, window_bounds = array<i64: 1, 256>}, {pipeline_mode = #tpu.pipeline_mode<synchronous>, transform_indices = @transform_5, window_bounds = array<i64: 256, 128>}, {pipeline_mode = #tpu.pipeline_mode<synchronous>, transform_indices = @transform_6, window_bounds = array<i64: 1, 128>}, {transform_indices = @transform_7, window_bounds = array<i64: 8, 128>}]} {
    %c0 = arith.constant 0 : index
    %c0_0 = arith.constant 0 : index
    %0 = vector.load %arg1[%c0, %c0_0] : memref<8x128xf32, #tpu.memory_space<vmem>>, vector<8x128xf32>
    %cst = arith.constant dense<0.000000e+00> : vector<8xf32>
    %1 = vector.multi_reduction <add>, %0, %cst [1] : vector<8x128xf32> to vector<8xf32>
    %2 = vector.shape_cast %1 : vector<8xf32> to vector<8x1xf32>
    %cst_1 = arith.constant 7.812500e-03 : f32
    %3 = vector.broadcast %cst_1 : f32 to vector<8x1xf32>
    %4 = arith.mulf %2, %3 : vector<8x1xf32>
    %5 = arith.mulf %0, %0 : vector<8x128xf32>
    %cst_2 = arith.constant dense<0.000000e+00> : vector<8xf32>
    %6 = vector.multi_reduction <add>, %5, %cst_2 [1] : vector<8x128xf32> to vector<8xf32>
    %7 = vector.shape_cast %6 : vector<8xf32> to vector<8x1xf32>
    %cst_3 = arith.constant 7.812500e-03 : f32
    %8 = vector.broadcast %cst_3 : f32 to vector<8x1xf32>
    %9 = arith.mulf %7, %8 : vector<8x1xf32>
    %10 = arith.mulf %4, %4 : vector<8x1xf32>
    %11 = arith.subf %9, %10 : vector<8x1xf32>
    %12 = vector.broadcast %4 : vector<8x1xf32> to vector<8x128xf32>
    %13 = arith.subf %0, %12 : vector<8x128xf32>
    %cst_4 = arith.constant 9.99999974E-6 : f32
    %14 = vector.broadcast %cst_4 : f32 to vector<8x1xf32>
    %15 = arith.addf %11, %14 : vector<8x1xf32>
    %16 = math.rsqrt %15 : vector<8x1xf32>
    %17 = vector.broadcast %16 : vector<8x1xf32> to vector<8x128xf32>
    %18 = arith.mulf %13, %17 : vector<8x128xf32>
    %19 = arith.truncf %18 : vector<8x128xf32> to vector<8x128xbf16>
    %c0_5 = arith.constant 0 : index
    %c0_6 = arith.constant 0 : index
    %20 = vector.load %arg2[%c0_5, %c0_6] : memref<128x512xbf16, #tpu.memory_space<vmem>>, vector<128x512xbf16>
    %cst_7 = arith.constant dense<0.000000e+00> : vector<8x512xf32>
    %21 = tpu.matmul %19, %20, %cst_7 {dimension_numbers = #tpu.dot_dimension_numbers<[1], [0], [0], [1], [0, 0, 1, 1], [], []>} : vector<8x128xbf16>, vector<128x512xbf16>, vector<8x512xf32> -> vector<8x512xf32>
    %c0_8 = arith.constant 0 : index
    %c0_9 = arith.constant 0 : index
    %22 = vector.load %arg3[%c0_8, %c0_9] : memref<1x512xf32, #tpu.memory_space<vmem>>, vector<1x512xf32>
    %23 = vector.broadcast %22 : vector<1x512xf32> to vector<8x512xf32>
    %24 = arith.addf %21, %23 : vector<8x512xf32>
    %cst_10 = arith.constant 0.000000e+00 : f32
    %25 = vector.broadcast %cst_10 : f32 to vector<8x512xf32>
    %26 = arith.maximumf %24, %25 : vector<8x512xf32>
    %27 = arith.truncf %26 : vector<8x512xf32> to vector<8x512xbf16>
    %c0_11 = arith.constant 0 : index
    %c0_12 = arith.constant 0 : index
    %28 = vector.load %arg4[%c0_11, %c0_12] : memref<512x256xbf16, #tpu.memory_space<vmem>>, vector<512x256xbf16>
    %cst_13 = arith.constant dense<0.000000e+00> : vector<8x256xf32>
    %29 = tpu.matmul %27, %28, %cst_13 {dimension_numbers = #tpu.dot_dimension_numbers<[1], [0], [0], [1], [0, 0, 1, 1], [], []>} : vector<8x512xbf16>, vector<512x256xbf16>, vector<8x256xf32> -> vector<8x256xf32>
    %c0_14 = arith.constant 0 : index
    %c0_15 = arith.constant 0 : index
    %30 = vector.load %arg5[%c0_14, %c0_15] : memref<1x256xf32, #tpu.memory_space<vmem>>, vector<1x256xf32>
    %31 = vector.broadcast %30 : vector<1x256xf32> to vector<8x256xf32>
    %32 = arith.addf %29, %31 : vector<8x256xf32>
    %cst_16 = arith.constant 0.000000e+00 : f32
    %33 = vector.broadcast %cst_16 : f32 to vector<8x256xf32>
    %34 = arith.maximumf %32, %33 : vector<8x256xf32>
    %35 = arith.truncf %34 : vector<8x256xf32> to vector<8x256xbf16>
    %c0_17 = arith.constant 0 : index
    %c0_18 = arith.constant 0 : index
    %36 = vector.load %arg6[%c0_17, %c0_18] : memref<256x128xbf16, #tpu.memory_space<vmem>>, vector<256x128xbf16>
    %cst_19 = arith.constant dense<0.000000e+00> : vector<8x128xf32>
    %37 = tpu.matmul %35, %36, %cst_19 {dimension_numbers = #tpu.dot_dimension_numbers<[1], [0], [0], [1], [0, 0, 1, 1], [], []>} : vector<8x256xbf16>, vector<256x128xbf16>, vector<8x128xf32> -> vector<8x128xf32>
    %c0_20 = arith.constant 0 : index
    %c0_21 = arith.constant 0 : index
    %38 = vector.load %arg7[%c0_20, %c0_21] : memref<1x128xf32, #tpu.memory_space<vmem>>, vector<1x128xf32>
    %39 = vector.broadcast %38 : vector<1x128xf32> to vector<8x128xf32>
    %40 = arith.addf %37, %39 : vector<8x128xf32>
    %c0_22 = arith.constant 0 : index
    %c0_23 = arith.constant 0 : index
    %41 = vector.load %arg8[%c0_22, %c0_23] : memref<8x128xf32, #tpu.memory_space<vmem>>, vector<8x128xf32>
    tpu.vector_store %arg8[%c0_22, %c0_23], %40 {strides = array<i32>} : memref<8x128xf32, #tpu.memory_space<vmem>>, vector<8x128xf32>,
    return
  }
  func.func @transform_0(%arg0: i32) -> (i32, i32) {
    %c0_i32 = arith.constant 0 : i32
    %c0_i32_0 = arith.constant 0 : i32
    return %arg0, %c0_i32 : i32, i32
  }
  func.func @transform_1(%arg0: i32) -> (i32, i32) {
    %c0_i32 = arith.constant 0 : i32
    %c0_i32_0 = arith.constant 0 : i32
    %c0_i32_1 = arith.constant 0 : i32
    return %c0_i32, %c0_i32_0 : i32, i32
  }
  func.func @transform_2(%arg0: i32) -> (i32, i32) {
    %c0_i32 = arith.constant 0 : i32
    %c0_i32_0 = arith.constant 0 : i32
    %c0_i32_1 = arith.constant 0 : i32
    return %c0_i32, %c0_i32_0 : i32, i32
  }
  func.func @transform_3(%arg0: i32) -> (i32, i32) {
    %c0_i32 = arith.constant 0 : i32
    %c0_i32_0 = arith.constant 0 : i32
    %c0_i32_1 = arith.constant 0 : i32
    return %c0_i32, %c0_i32_0 : i32, i32
  }
  func.func @transform_4(%arg0: i32) -> (i32, i32) {
    %c0_i32 = arith.constant 0 : i32
    %c0_i32_0 = arith.constant 0 : i32
    %c0_i32_1 = arith.constant 0 : i32
    return %c0_i32, %c0_i32_0 : i32, i32
  }
  func.func @transform_5(%arg0: i32) -> (i32, i32) {
    %c0_i32 = arith.constant 0 : i32
    %c0_i32_0 = arith.constant 0 : i32
    %c0_i32_1 = arith.constant 0 : i32
    return %c0_i32, %c0_i32_0 : i32, i32
  }
  func.func @transform_6(%arg0: i32) -> (i32, i32) {
    %c0_i32 = arith.constant 0 : i32
    %c0_i32_0 = arith.constant 0 : i32
    %c0_i32_1 = arith.constant 0 : i32
    return %c0_i32, %c0_i32_0 : i32, i32
  }
  func.func @transform_7(%arg0: i32) -> (i32, i32) {
    %c0_i32 = arith.constant 0 : i32
    %c0_i32_0 = arith.constant 0 : i32
    return %arg0, %c0_i32 : i32, i32
  }
}

</mosaic_0001>

<llo_original>
// kernel: tpu_custom_call.1
$region0: #{tpu_custom_call.1}
  #allocation0 [shape = 'u32[]', space=smem, size = 0x4, offset = 0x4, fixed_abs, tag = 'smem constant byte address 0x4 - core index']
  #allocation1 [shape = 'u32[144,128]{1,0:T(1,128)}', space=vmem, size = 0x12000, scoped, tag = 'internal scratch']
  %s0 = inlined_call_operand.hbm [shape: f32[8,128], index: 0, kind: input, shape index: {}]
  %s1 = inlined_call_operand.hbm [shape: bf16[128,512], index: 1, kind: input, shape index: {}]
  %s2 = inlined_call_operand.vmem [shape: f32[1,512], index: 2, kind: input, shape index: {}]
  %s3 = inlined_call_operand.hbm [shape: bf16[512,256], index: 3, kind: input, shape index: {}]
  %s4 = inlined_call_operand.vmem [shape: f32[1,256], index: 4, kind: input, shape index: {}]
  %s5 = inlined_call_operand.hbm [shape: bf16[256,128], index: 5, kind: input, shape index: {}]
  %s6 = inlined_call_operand.vmem [shape: f32[1,128], index: 6, kind: input, shape index: {}]
  %s7 = inlined_call_operand.hbm [shape: f32[8,128], index: 7, kind: output, shape index: {}]
  %s8 = sld [smem:[#allocation0]]
  $region54: #{tpu_custom_call.1} parent=0
    _
  %s10 = ssub.s32 1, %s8
  %s11 = scalar_select 0, %s10, %s8
  $region1: #{tpu_custom_call.1} parent=0
    #allocation2 [shape = 'u8[4096]{0}', space=vmem, size = 0x1000, scoped, tag = 'input window, operand 0, single buffered']
    #allocation3 [shape = 's32[1]{0}', space=sflag, size = 0x4, scoped, tag = 'scoped memory for tpu_custom_call.1']
    #allocation4 [shape = 's32[1]{0}', space=sflag, size = 0x4, scoped, tag = 'scoped memory for tpu_custom_call.1']
    #allocation5 [shape = 'u8[131072]{0}', space=vmem, size = 0x20000, scoped, tag = 'input window, operand 1, single buffered']
    #allocation6 [shape = 's32[1]{0}', space=sflag, size = 0x4, scoped, tag = 'scoped memory for tpu_custom_call.1']
    #allocation7 [shape = 'u8[262144]{0}', space=vmem, size = 0x40000, scoped, tag = 'input window, operand 3, single buffered']
    #allocation8 [shape = 'u8[65536]{0}', space=vmem, size = 0x10000, scoped, tag = 'input window, operand 5, single buffered']
    #allocation9 [shape = 's32[1]{0}', space=sflag, size = 0x4, scoped, tag = 'scoped memory for tpu_custom_call.1']
    #allocation10 [shape = 'u8[4096]{0}', space=vmem, size = 0x1000, scoped, tag = 'output window, operand 0, single buffered']
    %12 = vsyncpa [#allocation3], 0
    %13 = vsyncpa [#allocation6], 0
    %14 = vsyncpa [#allocation9], 0
    %15 = vsyncpa [#allocation4], 0
    // Predicated region
    $region2: #{tpu_custom_call.1} parent=1 // pred_check
      _
    $region3: #{tpu_custom_call.1} parent=1 // pred_check_branch
      %17 = sbr.rel (0) target = $region5
    $region4: #{tpu_custom_call.1} parent=1 // pred_region
      %s19 = ssub.s32 128, 128
      %20 = vsyncadd [#allocation3], %s19
      %s22 = sshll.u32 [#allocation2], 4
      %s23 = int_to_ptr.vmem [resolvable:$true] %s22
      %25 = dma.hbm_to_vmem [thread:$0]  %s0, 128, %s23, [#allocation3]
    $region5: #{tpu_custom_call.1} parent=1 // pred_fallthru
      _
    // Predicated region
    $region6: #{tpu_custom_call.1} parent=1 // pred_check
      _
    $region7: #{tpu_custom_call.1} parent=1 // pred_check_branch
      %27 = sbr.rel (0) target = $region9
    $region8: #{tpu_custom_call.1} parent=1 // pred_region
      %s29 = ssub.s32 4096, 4096
      %30 = vsyncadd [#allocation6], %s29
      %s31 = sshll.u32 [#allocation5], 4
      %s32 = int_to_ptr.vmem [resolvable:$true] %s31
      %37 = dma.hbm_to_vmem [thread:$0]  %s1, 4096, %s32, [#allocation6], 256, 256, 16
    $region9: #{tpu_custom_call.1} parent=1 // pred_fallthru
      _
    // Predicated region
    $region10: #{tpu_custom_call.1} parent=1 // pred_check
      _
    $region11: #{tpu_custom_call.1} parent=1 // pred_check_branch
      %39 = sbr.rel (0) target = $region13
    $region12: #{tpu_custom_call.1} parent=1 // pred_region
      _
    $region13: #{tpu_custom_call.1} parent=1 // pred_fallthru
      _
    // Predicated region
    $region14: #{tpu_custom_call.1} parent=1 // pred_check
      _
    $region15: #{tpu_custom_call.1} parent=1 // pred_check_branch
      %41 = sbr.rel (0) target = $region17
    $region16: #{tpu_custom_call.1} parent=1 // pred_region
      %s43 = ssub.s32 8192, 8192
      %44 = vsyncadd [#allocation6], %s43
      %s45 = sshll.u32 [#allocation7], 4
      %s46 = int_to_ptr.vmem [resolvable:$true] %s45
      %51 = dma.hbm_to_vmem [thread:$0]  %s3, 8192, %s46, [#allocation6], 128, 128, 8
    $region17: #{tpu_custom_call.1} parent=1 // pred_fallthru
      _
    // Predicated region
    $region18: #{tpu_custom_call.1} parent=1 // pred_check
      _
    $region19: #{tpu_custom_call.1} parent=1 // pred_check_branch
      %53 = sbr.rel (0) target = $region21
    $region20: #{tpu_custom_call.1} parent=1 // pred_region
      _
    $region21: #{tpu_custom_call.1} parent=1 // pred_fallthru
      _
    // Predicated region
    $region22: #{tpu_custom_call.1} parent=1 // pred_check
      _
    $region23: #{tpu_custom_call.1} parent=1 // pred_check_branch
      %55 = sbr.rel (0) target = $region25
    $region24: #{tpu_custom_call.1} parent=1 // pred_region
      %s57 = ssub.s32 2048, 2048
      %58 = vsyncadd [#allocation9], %s57
      %s59 = sshll.u32 [#allocation8], 4
      %s60 = int_to_ptr.vmem [resolvable:$true] %s59
      %65 = dma.hbm_to_vmem [thread:$0]  %s5, 2048, %s60, [#allocation9], 64, 64, 4
    $region25: #{tpu_custom_call.1} parent=1 // pred_fallthru
      _
    // Predicated region
    $region26: #{tpu_custom_call.1} parent=1 // pred_check
      _
    $region27: #{tpu_custom_call.1} parent=1 // pred_check_branch
      %67 = sbr.rel (0) target = $region29
    $region28: #{tpu_custom_call.1} parent=1 // pred_region
      _
    $region29: #{tpu_custom_call.1} parent=1 // pred_fallthru
      _
    // Predicated region
    $region30: #{tpu_custom_call.1} parent=1 // pred_check
      _
    $region31: #{tpu_custom_call.1} parent=1 // pred_check_branch
      %69 = sbr.rel (0) target = $region33
    $region32: #{tpu_custom_call.1} parent=1 // pred_region
      %70 = dma.done [#allocation3], 128
    $region33: #{tpu_custom_call.1} parent=1 // pred_fallthru
      _
    // Predicated region
    $region34: #{tpu_custom_call.1} parent=1 // pred_check
      _
    $region35: #{tpu_custom_call.1} parent=1 // pred_check_branch
      %72 = sbr.rel (0) target = $region37
    $region36: #{tpu_custom_call.1} parent=1 // pred_region
      %73 = dma.done [#allocation6], 4096
    $region37: #{tpu_custom_call.1} parent=1 // pred_fallthru
      _
    // Predicated region
    $region38: #{tpu_custom_call.1} parent=1 // pred_check
      _
    $region39: #{tpu_custom_call.1} parent=1 // pred_check_branch
      %75 = sbr.rel (0) target = $region41
    $region40: #{tpu_custom_call.1} parent=1 // pred_region
      %76 = dma.done [#allocation6], 8192
    $region41: #{tpu_custom_call.1} parent=1 // pred_fallthru
      _
    // Predicated region
    $region42: #{tpu_custom_call.1} parent=1 // pred_check
      _
    $region43: #{tpu_custom_call.1} parent=1 // pred_check_branch
      %78 = sbr.rel (0) target = $region45
    $region44: #{tpu_custom_call.1} parent=1 // pred_region
      %79 = dma.done [#allocation9], 2048
    $region45: #{tpu_custom_call.1} parent=1 // pred_fallthru
      _
    %v81 = vld [vmem:[#allocation2] sm:$0xff]
    %82 = vadd.xlane.f32.xlu0 %v81
    %v83 = vpop.xlane.xlu0 %82
    %v84 = vmul.f32 %v83, 0.0078125
    %v85 = vmul.f32 %v81, %v81
    %86 = vadd.xlane.f32.xlu0 %v85
    %v87 = vpop.xlane.xlu0 %86
    %v88 = vmul.f32 %v87, 0.0078125
    %v89 = vmul.f32 %v84, %v84
    %v90 = vsub.f32 %v88, %v89
    %v91 = vsub.f32 %v81, %v84
    %v92 = vadd.f32 %v90, 1e-05
    %v93 = vrsqrt.pop %v92
    %v94 = vmul.f32 %v91, %v93
    %v95 = vpack.c.bf16 %v94, %v94
    %v96 = vld [vmem:[#allocation5] sm:$0xff]
    %v97 = vld [vmem:[#allocation5 + $0x8] sm:$0xff]
    %v98 = vld [vmem:[#allocation5 + $0x10] sm:$0xff]
    %v99 = vld [vmem:[#allocation5 + $0x18] sm:$0xff]
    %v100 = vld [vmem:[#allocation5 + $0x20] sm:$0xff]
    %v101 = vld [vmem:[#allocation5 + $0x28] sm:$0xff]
    %v102 = vld [vmem:[#allocation5 + $0x30] sm:$0xff]
    %v103 = vld [vmem:[#allocation5 + $0x38] sm:$0xff]
    %v104 = vld [vmem:[#allocation5 + $0x40] sm:$0xff]
    %v105 = vld [vmem:[#allocation5 + $0x48] sm:$0xff]
    %v106 = vld [vmem:[#allocation5 + $0x50] sm:$0xff]
    %v107 = vld [vmem:[#allocation5 + $0x58] sm:$0xff]
    %v108 = vld [vmem:[#allocation5 + $0x60] sm:$0xff]
    %v109 = vld [vmem:[#allocation5 + $0x68] sm:$0xff]
    %v110 = vld [vmem:[#allocation5 + $0x70] sm:$0xff]
    %v111 = vld [vmem:[#allocation5 + $0x78] sm:$0xff]
    %v112 = vld [vmem:[#allocation5 + $0x80] sm:$0xff]
    %v113 = vld [vmem:[#allocation5 + $0x88] sm:$0xff]
    %v114 = vld [vmem:[#allocation5 + $0x90] sm:$0xff]
    %v115 = vld [vmem:[#allocation5 + $0x98] sm:$0xff]
    %v116 = vld [vmem:[#allocation5 + $0xa0] sm:$0xff]
    %v117 = vld [vmem:[#allocation5 + $0xa8] sm:$0xff]
    %v118 = vld [vmem:[#allocation5 + $0xb0] sm:$0xff]
    %v119 = vld [vmem:[#allocation5 + $0xb8] sm:$0xff]
    %v120 = vld [vmem:[#allocation5 + $0xc0] sm:$0xff]
    %v121 = vld [vmem:[#allocation5 + $0xc8] sm:$0xff]
    %v122 = vld [vmem:[#allocation5 + $0xd0] sm:$0xff]
    %v123 = vld [vmem:[#allocation5 + $0xd8] sm:$0xff]
    %v124 = vld [vmem:[#allocation5 + $0xe0] sm:$0xff]
    %v125 = vld [vmem:[#allocation5 + $0xe8] sm:$0xff]
    %v126 = vld [vmem:[#allocation5 + $0xf0] sm:$0xff]
    %v127 = vld [vmem:[#allocation5 + $0xf8] sm:$0xff]
    %v128 = vld [vmem:[%s2] sm:$0xf]
    %v130 = vlaneseq
    %v131 = vshrl.u32 %v130, 7
    %v132 = vsub.s32 0, %v131
    %v133 = vrot.slane %v128, %v132
    %v134 = vlaneseq
    %v135 = vshrl.u32 %v134, 7
    %v136 = vsub.s32 1, %v135
    %v137 = vrot.slane %v128, %v136
    %v138 = vlaneseq
    %v139 = vshrl.u32 %v138, 7
    %v140 = vsub.s32 2, %v139
    %v141 = vrot.slane %v128, %v140
    %v142 = vlaneseq
    %v143 = vshrl.u32 %v142, 7
    %v144 = vsub.s32 3, %v143
    %v145 = vrot.slane %v128, %v144
    %v182 = vunpack.c.l.b16 %v96
    %v183 = vunpack.c.h.b16 %v96
    %v184 = vunpack.c.l.b16 %v97
    %v185 = vunpack.c.h.b16 %v97
    %v186 = vunpack.c.l.b16 %v98
    %v187 = vunpack.c.h.b16 %v98
    %v188 = vunpack.c.l.b16 %v99
    %v189 = vunpack.c.h.b16 %v99
    %v190 = vunpack.c.l.b16 %v100
    %v191 = vunpack.c.h.b16 %v100
    %v192 = vunpack.c.l.b16 %v101
    %v193 = vunpack.c.h.b16 %v101
    %v194 = vunpack.c.l.b16 %v102
    %v195 = vunpack.c.h.b16 %v102
    %v196 = vunpack.c.l.b16 %v103
    %v197 = vunpack.c.h.b16 %v103
    %v198 = vunpack.c.l.b16 %v104
    %v199 = vunpack.c.h.b16 %v104
    %v200 = vunpack.c.l.b16 %v105
    %v201 = vunpack.c.h.b16 %v105
    %v202 = vunpack.c.l.b16 %v106
    %v203 = vunpack.c.h.b16 %v106
    %v204 = vunpack.c.l.b16 %v107
    %v205 = vunpack.c.h.b16 %v107
    %v206 = vunpack.c.l.b16 %v108
    %v207 = vunpack.c.h.b16 %v108
    %v208 = vunpack.c.l.b16 %v109
    %v209 = vunpack.c.h.b16 %v109
    %v210 = vunpack.c.l.b16 %v110
    %v211 = vunpack.c.h.b16 %v110
    %v212 = vunpack.c.l.b16 %v111
    %v213 = vunpack.c.h.b16 %v111
    %v214 = vunpack.c.l.b16 %v112
    %v215 = vunpack.c.h.b16 %v112
    %v216 = vunpack.c.l.b16 %v113
    %v217 = vunpack.c.h.b16 %v113
    %v218 = vunpack.c.l.b16 %v114
    %v219 = vunpack.c.h.b16 %v114
    %v220 = vunpack.c.l.b16 %v115
    %v221 = vunpack.c.h.b16 %v115
    %v222 = vunpack.c.l.b16 %v116
    %v223 = vunpack.c.h.b16 %v116
    %v224 = vunpack.c.l.b16 %v117
    %v225 = vunpack.c.h.b16 %v117
    %v226 = vunpack.c.l.b16 %v118
    %v227 = vunpack.c.h.b16 %v118
    %v228 = vunpack.c.l.b16 %v119
    %v229 = vunpack.c.h.b16 %v119
    %v230 = vunpack.c.l.b16 %v120
    %v231 = vunpack.c.h.b16 %v120
    %v232 = vunpack.c.l.b16 %v121
    %v233 = vunpack.c.h.b16 %v121
    %v234 = vunpack.c.l.b16 %v122
    %v235 = vunpack.c.h.b16 %v122
    %v236 = vunpack.c.l.b16 %v123
    %v237 = vunpack.c.h.b16 %v123
    %v238 = vunpack.c.l.b16 %v124
    %v239 = vunpack.c.h.b16 %v124
    %v240 = vunpack.c.l.b16 %v125
    %v241 = vunpack.c.h.b16 %v125
    %v242 = vunpack.c.l.b16 %v126
    %v243 = vunpack.c.h.b16 %v126
    %v244 = vunpack.c.l.b16 %v127
    %v245 = vunpack.c.h.b16 %v127
    %v246 = vpack.c.b16 %v186, %v182
    %v247 = vpack.c.b16 %v187, %v183
    %v248 = vpack.c.b16 %v188, %v184
    %v249 = vpack.c.b16 %v189, %v185
    %v250 = vpack.c.b16 %v194, %v190
    %v251 = vpack.c.b16 %v195, %v191
    %v252 = vpack.c.b16 %v196, %v192
    %v253 = vpack.c.b16 %v197, %v193
    %v254 = vpack.c.b16 %v202, %v198
    %v255 = vpack.c.b16 %v203, %v199
    %v256 = vpack.c.b16 %v204, %v200
    %v257 = vpack.c.b16 %v205, %v201
    %v258 = vpack.c.b16 %v210, %v206
    %v259 = vpack.c.b16 %v211, %v207
    %v260 = vpack.c.b16 %v212, %v208
    %v261 = vpack.c.b16 %v213, %v209
    %v262 = vpack.c.b16 %v218, %v214
    %v263 = vpack.c.b16 %v219, %v215
    %v264 = vpack.c.b16 %v220, %v216
    %v265 = vpack.c.b16 %v221, %v217
    %v266 = vpack.c.b16 %v226, %v222
    %v267 = vpack.c.b16 %v227, %v223
    %v268 = vpack.c.b16 %v228, %v224
    %v269 = vpack.c.b16 %v229, %v225
    %v270 = vpack.c.b16 %v234, %v230
    %v271 = vpack.c.b16 %v235, %v231
    %v272 = vpack.c.b16 %v236, %v232
    %v273 = vpack.c.b16 %v237, %v233
    %v274 = vpack.c.b16 %v242, %v238
    %v275 = vpack.c.b16 %v243, %v239
    %v276 = vpack.c.b16 %v244, %v240
    %v277 = vpack.c.b16 %v245, %v241
    %310 = vmatprep.subr.bf16.mxu0 %v247
    %311 = vmatpush1.bf16.msra.mxu0 %v246
    %312 = vmatprep.subr.bf16.mxu0 %v251
    %313 = vmatpush1.bf16.msra.mxu0 %v250
    %314 = vmatprep.subr.bf16.mxu0 %v255
    %315 = vmatpush1.bf16.msra.mxu0 %v254
    %316 = vmatprep.subr.bf16.mxu0 %v259
    %317 = vmatpush1.bf16.msra.mxu0 %v258
    %318 = vmatprep.subr.bf16.mxu0 %v263
    %319 = vmatpush1.bf16.msra.mxu0 %v262
    %320 = vmatprep.subr.bf16.mxu0 %v267
    %321 = vmatpush1.bf16.msra.mxu0 %v266
    %322 = vmatprep.subr.bf16.mxu0 %v271
    %323 = vmatpush1.bf16.msra.mxu0 %v270
    %324 = vmatprep.subr.bf16.mxu0 %v275
    %325 = vmatpush1.bf16.msra.mxu0 %v274
    %326 = vmatprep.subr.bf16.mxu0 0
    %327 = vmatpush1.bf16.msra.mxu0 0
    %328 = vmatprep.subr.bf16.mxu0 0
    %329 = vmatpush1.bf16.msra.mxu0 0
    %330 = vmatprep.subr.bf16.mxu0 0
    %331 = vmatpush1.bf16.msra.mxu0 0
    %332 = vmatprep.subr.bf16.mxu0 0
    %333 = vmatpush1.bf16.msra.mxu0 0
    %334 = vmatprep.subr.bf16.mxu0 0
    %335 = vmatpush1.bf16.msra.mxu0 0
    %336 = vmatprep.subr.bf16.mxu0 0
    %337 = vmatpush1.bf16.msra.mxu0 0
    %338 = vmatprep.subr.bf16.mxu0 0
    %339 = vmatpush1.bf16.msra.mxu0 0
    %340 = vmatprep.subr.bf16.mxu0 0
    %341 = vmatpush1.bf16.msra.mxu0 0
    %342 = vmatprep.mubr.bf16.mxu0 0
    %343 = vmatmul.mubr.bf16.gmra.mrb[0].mxu0 %v95
    %v344 = vpop.f32.mrb[0].mxu0
    %v345 = vadd.f32 %v133, %v344
    %v346 = vpop.f32.mrb[0].mxu0
    %v347 = vadd.f32 %v137, %v346
    %v348 = vpop.f32.mrb[0].mxu0
    %v349 = vpop.f32.mrb[0].mxu0
    %350 = vdwg.mxu0
    %351 = vmatprep.subr.bf16.mxu0 %v249
    %352 = vmatpush1.bf16.msra.mxu0 %v248
    %353 = vmatprep.subr.bf16.mxu0 %v253
    %354 = vmatpush1.bf16.msra.mxu0 %v252
    %355 = vmatprep.subr.bf16.mxu0 %v257
    %356 = vmatpush1.bf16.msra.mxu0 %v256
    %357 = vmatprep.subr.bf16.mxu0 %v261
    %358 = vmatpush1.bf16.msra.mxu0 %v260
    %359 = vmatprep.subr.bf16.mxu0 %v265
    %360 = vmatpush1.bf16.msra.mxu0 %v264
    %361 = vmatprep.subr.bf16.mxu0 %v269
    %362 = vmatpush1.bf16.msra.mxu0 %v268
    %363 = vmatprep.subr.bf16.mxu0 %v273
    %364 = vmatpush1.bf16.msra.mxu0 %v272
    %365 = vmatprep.subr.bf16.mxu0 %v277
    %366 = vmatpush1.bf16.msra.mxu0 %v276
    %367 = vmatprep.subr.bf16.mxu0 0
    %368 = vmatpush1.bf16.msra.mxu0 0
    %369 = vmatprep.subr.bf16.mxu0 0
    %370 = vmatpush1.bf16.msra.mxu0 0
    %371 = vmatprep.subr.bf16.mxu0 0
    %372 = vmatpush1.bf16.msra.mxu0 0
    %373 = vmatprep.subr.bf16.mxu0 0
    %374 = vmatpush1.bf16.msra.mxu0 0
    %375 = vmatprep.subr.bf16.mxu0 0
    %376 = vmatpush1.bf16.msra.mxu0 0
    %377 = vmatprep.subr.bf16.mxu0 0
    %378 = vmatpush1.bf16.msra.mxu0 0
    %379 = vmatprep.subr.bf16.mxu0 0
    %380 = vmatpush1.bf16.msra.mxu0 0
    %381 = vmatprep.subr.bf16.mxu0 0
    %382 = vmatpush1.bf16.msra.mxu0 0
    %383 = vmatprep.mubr.bf16.mxu0 0
    %384 = vmatmul.mubr.bf16.gmra.mrb[0].mxu0 %v95
    %v385 = vpop.f32.mrb[0].mxu0
    %v386 = vadd.f32 %v141, %v385
    %v387 = vpop.f32.mrb[0].mxu0
    %v388 = vadd.f32 %v145, %v387
    %v389 = vpop.f32.mrb[0].mxu0
    %v390 = vpop.f32.mrb[0].mxu0
    %391 = vdwg.mxu0
    %v392 = vmax.f32 %v345, 0.0
    %v393 = vmax.f32 %v347, 0.0
    %v394 = vmax.f32 %v386, 0.0
    %v395 = vmax.f32 %v388, 0.0
    %v396 = vpack.c.bf16 %v392, %v392
    %v397 = vpack.c.bf16 %v393, %v393
    %v398 = vpack.c.bf16 %v394, %v394
    %v399 = vpack.c.bf16 %v395, %v395
    %v400 = vld [vmem:[#allocation7] sm:$0xff]
    %v401 = vld [vmem:[#allocation7 + $0x8] sm:$0xff]
    %v402 = vld [vmem:[#allocation7 + $0x10] sm:$0xff]
    %v403 = vld [vmem:[#allocation7 + $0x18] sm:$0xff]
    %v404 = vld [vmem:[#allocation7 + $0x20] sm:$0xff]
    %v405 = vld [vmem:[#allocation7 + $0x28] sm:$0xff]
    %v406 = vld [vmem:[#allocation7 + $0x30] sm:$0xff]
    %v407 = vld [vmem:[#allocation7 + $0x38] sm:$0xff]
    %v408 = vld [vmem:[#allocation7 + $0x40] sm:$0xff]
    %v409 = vld [vmem:[#allocation7 + $0x48] sm:$0xff]
    %v410 = vld [vmem:[#allocation7 + $0x50] sm:$0xff]
    %v411 = vld [vmem:[#allocation7 + $0x58] sm:$0xff]
    %v412 = vld [vmem:[#allocation7 + $0x60] sm:$0xff]
    %v413 = vld [vmem:[#allocation7 + $0x68] sm:$0xff]
    %v414 = vld [vmem:[#allocation7 + $0x70] sm:$0xff]
    %v415 = vld [vmem:[#allocation7 + $0x78] sm:$0xff]
    %v416 = vld [vmem:[#allocation7 + $0x80] sm:$0xff]
    %v417 = vld [vmem:[#allocation7 + $0x88] sm:$0xff]
    %v418 = vld [vmem:[#allocation7 + $0x90] sm:$0xff]
    %v419 = vld [vmem:[#allocation7 + $0x98] sm:$0xff]
    %v420 = vld [vmem:[#allocation7 + $0xa0] sm:$0xff]
    %v421 = vld [vmem:[#allocation7 + $0xa8] sm:$0xff]
    %v422 = vld [vmem:[#allocation7 + $0xb0] sm:$0xff]
    %v423 = vld [vmem:[#allocation7 + $0xb8] sm:$0xff]
    %v424 = vld [vmem:[#allocation7 + $0xc0] sm:$0xff]
    %v425 = vld [vmem:[#allocation7 + $0xc8] sm:$0xff]
    %v426 = vld [vmem:[#allocation7 + $0xd0] sm:$0xff]
    %v427 = vld [vmem:[#allocation7 + $0xd8] sm:$0xff]
    %v428 = vld [vmem:[#allocation7 + $0xe0] sm:$0xff]
    %v429 = vld [vmem:[#allocation7 + $0xe8] sm:$0xff]
    %v430 = vld [vmem:[#allocation7 + $0xf0] sm:$0xff]
    %v431 = vld [vmem:[#allocation7 + $0xf8] sm:$0xff]
    %v432 = vld [vmem:[#allocation7 + $0x100] sm:$0xff]
    %v433 = vld [vmem:[#allocation7 + $0x108] sm:$0xff]
    %v434 = vld [vmem:[#allocation7 + $0x110] sm:$0xff]
    %v435 = vld [vmem:[#allocation7 + $0x118] sm:$0xff]
    %v436 = vld [vmem:[#allocation7 + $0x120] sm:$0xff]
    %v437 = vld [vmem:[#allocation7 + $0x128] sm:$0xff]
    %v438 = vld [vmem:[#allocation7 + $0x130] sm:$0xff]
    %v439 = vld [vmem:[#allocation7 + $0x138] sm:$0xff]
    %v440 = vld [vmem:[#allocation7 + $0x140] sm:$0xff]
    %v441 = vld [vmem:[#allocation7 + $0x148] sm:$0xff]
    %v442 = vld [vmem:[#allocation7 + $0x150] sm:$0xff]
    %v443 = vld [vmem:[#allocation7 + $0x158] sm:$0xff]
    %v444 = vld [vmem:[#allocation7 + $0x160] sm:$0xff]
    %v445 = vld [vmem:[#allocation7 + $0x168] sm:$0xff]
    %v446 = vld [vmem:[#allocation7 + $0x170] sm:$0xff]
    %v447 = vld [vmem:[#allocation7 + $0x178] sm:$0xff]
    %v448 = vld [vmem:[#allocation7 + $0x180] sm:$0xff]
    %v449 = vld [vmem:[#allocation7 + $0x188] sm:$0xff]
    %v450 = vld [vmem:[#allocation7 + $0x190] sm:$0xff]
    %v451 = vld [vmem:[#allocation7 + $0x198] sm:$0xff]
    %v452 = vld [vmem:[#allocation7 + $0x1a0] sm:$0xff]
    %v453 = vld [vmem:[#allocation7 + $0x1a8] sm:$0xff]
    %v454 = vld [vmem:[#allocation7 + $0x1b0] sm:$0xff]
    %v455 = vld [vmem:[#allocation7 + $0x1b8] sm:$0xff]
    %v456 = vld [vmem:[#allocation7 + $0x1c0] sm:$0xff]
    %v457 = vld [vmem:[#allocation7 + $0x1c8] sm:$0xff]
    %v458 = vld [vmem:[#allocation7 + $0x1d0] sm:$0xff]
    %v459 = vld [vmem:[#allocation7 + $0x1d8] sm:$0xff]
    %v460 = vld [vmem:[#allocation7 + $0x1e0] sm:$0xff]
    %v461 = vld [vmem:[#allocation7 + $0x1e8] sm:$0xff]
    %v462 = vld [vmem:[#allocation7 + $0x1f0] sm:$0xff]
    %v463 = vld [vmem:[#allocation7 + $0x1f8] sm:$0xff]
    %v464 = vld [vmem:[%s4] sm:$0x3]
    %v466 = vlaneseq
    %v467 = vshrl.u32 %v466, 7
    %v468 = vsub.s32 0, %v467
    %v469 = vrot.slane %v464, %v468
    %v470 = vlaneseq
    %v471 = vshrl.u32 %v470, 7
    %v472 = vsub.s32 1, %v471
    %v473 = vrot.slane %v464, %v472
    %v540 = vunpack.c.l.b16 %v400
    %v541 = vunpack.c.h.b16 %v400
    %v542 = vunpack.c.l.b16 %v401
    %v543 = vunpack.c.h.b16 %v401
    %v544 = vunpack.c.l.b16 %v402
    %v545 = vunpack.c.h.b16 %v402
    %v546 = vunpack.c.l.b16 %v403
    %v547 = vunpack.c.h.b16 %v403
    %v548 = vunpack.c.l.b16 %v404
    %v549 = vunpack.c.h.b16 %v404
    %v550 = vunpack.c.l.b16 %v405
    %v551 = vunpack.c.h.b16 %v405
    %v552 = vunpack.c.l.b16 %v406
    %v553 = vunpack.c.h.b16 %v406
    %v554 = vunpack.c.l.b16 %v407
    %v555 = vunpack.c.h.b16 %v407
    %v556 = vunpack.c.l.b16 %v408
    %v557 = vunpack.c.h.b16 %v408
    %v558 = vunpack.c.l.b16 %v409
    %v559 = vunpack.c.h.b16 %v409
    %v560 = vunpack.c.l.b16 %v410
    %v561 = vunpack.c.h.b16 %v410
    %v562 = vunpack.c.l.b16 %v411
    %v563 = vunpack.c.h.b16 %v411
    %v564 = vunpack.c.l.b16 %v412
    %v565 = vunpack.c.h.b16 %v412
    %v566 = vunpack.c.l.b16 %v413
    %v567 = vunpack.c.h.b16 %v413
    %v568 = vunpack.c.l.b16 %v414
    %v569 = vunpack.c.h.b16 %v414
    %v570 = vunpack.c.l.b16 %v415
    %v571 = vunpack.c.h.b16 %v415
    %v572 = vunpack.c.l.b16 %v416
    %v573 = vunpack.c.h.b16 %v416
    %v574 = vunpack.c.l.b16 %v417
    %v575 = vunpack.c.h.b16 %v417
    %v576 = vunpack.c.l.b16 %v418
    %v577 = vunpack.c.h.b16 %v418
    %v578 = vunpack.c.l.b16 %v419
    %v579 = vunpack.c.h.b16 %v419
    %v580 = vunpack.c.l.b16 %v420
    %v581 = vunpack.c.h.b16 %v420
    %v582 = vunpack.c.l.b16 %v421
    %v583 = vunpack.c.h.b16 %v421
    %v584 = vunpack.c.l.b16 %v422
    %v585 = vunpack.c.h.b16 %v422
    %v586 = vunpack.c.l.b16 %v423
    %v587 = vunpack.c.h.b16 %v423
    %v588 = vunpack.c.l.b16 %v424
    %v589 = vunpack.c.h.b16 %v424
    %v590 = vunpack.c.l.b16 %v425
    %v591 = vunpack.c.h.b16 %v425
    %v592 = vunpack.c.l.b16 %v426
    %v593 = vunpack.c.h.b16 %v426
    %v594 = vunpack.c.l.b16 %v427
    %v595 = vunpack.c.h.b16 %v427
    %v596 = vunpack.c.l.b16 %v428
    %v597 = vunpack.c.h.b16 %v428
    %v598 = vunpack.c.l.b16 %v429
    %v599 = vunpack.c.h.b16 %v429
    %v600 = vunpack.c.l.b16 %v430
    %v601 = vunpack.c.h.b16 %v430
    %v602 = vunpack.c.l.b16 %v431
    %v603 = vunpack.c.h.b16 %v431
    %v604 = vunpack.c.l.b16 %v432
    %v605 = vunpack.c.h.b16 %v432
    %v606 = vunpack.c.l.b16 %v433
    %v607 = vunpack.c.h.b16 %v433
    %v608 = vunpack.c.l.b16 %v434
    %v609 = vunpack.c.h.b16 %v434
    %v610 = vunpack.c.l.b16 %v435
    %v611 = vunpack.c.h.b16 %v435
    %v612 = vunpack.c.l.b16 %v436
    %v613 = vunpack.c.h.b16 %v436
    %v614 = vunpack.c.l.b16 %v437
    %v615 = vunpack.c.h.b16 %v437
    %v616 = vunpack.c.l.b16 %v438
    %v617 = vunpack.c.h.b16 %v438
    %v618 = vunpack.c.l.b16 %v439
    %v619 = vunpack.c.h.b16 %v439
    %v620 = vunpack.c.l.b16 %v440
    %v621 = vunpack.c.h.b16 %v440
    %v622 = vunpack.c.l.b16 %v441
    %v623 = vunpack.c.h.b16 %v441
    %v624 = vunpack.c.l.b16 %v442
    %v625 = vunpack.c.h.b16 %v442
    %v626 = vunpack.c.l.b16 %v443
    %v627 = vunpack.c.h.b16 %v443
    %v628 = vunpack.c.l.b16 %v444
    %v629 = vunpack.c.h.b16 %v444
    %v630 = vunpack.c.l.b16 %v445
    %v631 = vunpack.c.h.b16 %v445
    %v632 = vunpack.c.l.b16 %v446
    %v633 = vunpack.c.h.b16 %v446
    %v634 = vunpack.c.l.b16 %v447
    %v635 = vunpack.c.h.b16 %v447
    %v636 = vunpack.c.l.b16 %v448
    %v637 = vunpack.c.h.b16 %v448
    %v638 = vunpack.c.l.b16 %v449
    %v639 = vunpack.c.h.b16 %v449
    %v640 = vunpack.c.l.b16 %v450
    %v641 = vunpack.c.h.b16 %v450
    %v642 = vunpack.c.l.b16 %v451
    %v643 = vunpack.c.h.b16 %v451
    %v644 = vunpack.c.l.b16 %v452
    %v645 = vunpack.c.h.b16 %v452
    %v646 = vunpack.c.l.b16 %v453
    %v647 = vunpack.c.h.b16 %v453
    %v648 = vunpack.c.l.b16 %v454
    %v649 = vunpack.c.h.b16 %v454
    %v650 = vunpack.c.l.b16 %v455
    %v651 = vunpack.c.h.b16 %v455
    %v652 = vunpack.c.l.b16 %v456
    %v653 = vunpack.c.h.b16 %v456
    %v654 = vunpack.c.l.b16 %v457
    %v655 = vunpack.c.h.b16 %v457
    %v656 = vunpack.c.l.b16 %v458
    %v657 = vunpack.c.h.b16 %v458
    %v658 = vunpack.c.l.b16 %v459
    %v659 = vunpack.c.h.b16 %v459
    %v660 = vunpack.c.l.b16 %v460
    %v661 = vunpack.c.h.b16 %v460
    %v662 = vunpack.c.l.b16 %v461
    %v663 = vunpack.c.h.b16 %v461
    %v664 = vunpack.c.l.b16 %v462
    %v665 = vunpack.c.h.b16 %v462
    %v666 = vunpack.c.l.b16 %v463
    %v667 = vunpack.c.h.b16 %v463
    %v668 = vpack.c.b16 %v542, %v540
    %v669 = vpack.c.b16 %v543, %v541
    %v670 = vpack.c.b16 %v546, %v544
    %v671 = vpack.c.b16 %v547, %v545
    %v672 = vpack.c.b16 %v550, %v548
    %v673 = vpack.c.b16 %v551, %v549
    %v674 = vpack.c.b16 %v554, %v552
    %v675 = vpack.c.b16 %v555, %v553
    %v676 = vpack.c.b16 %v558, %v556
    %v677 = vpack.c.b16 %v559, %v557
    %v678 = vpack.c.b16 %v562, %v560
    %v679 = vpack.c.b16 %v563, %v561
    %v680 = vpack.c.b16 %v566, %v564
    %v681 = vpack.c.b16 %v567, %v565
    %v682 = vpack.c.b16 %v570, %v568
    %v683 = vpack.c.b16 %v571, %v569
    %v684 = vpack.c.b16 %v574, %v572
    %v685 = vpack.c.b16 %v575, %v573
    %v686 = vpack.c.b16 %v578, %v576
    %v687 = vpack.c.b16 %v579, %v577
    %v688 = vpack.c.b16 %v582, %v580
    %v689 = vpack.c.b16 %v583, %v581
    %v690 = vpack.c.b16 %v586, %v584
    %v691 = vpack.c.b16 %v587, %v585
    %v692 = vpack.c.b16 %v590, %v588
    %v693 = vpack.c.b16 %v591, %v589
    %v694 = vpack.c.b16 %v594, %v592
    %v695 = vpack.c.b16 %v595, %v593
    %v696 = vpack.c.b16 %v598, %v596
    %v697 = vpack.c.b16 %v599, %v597
    %v698 = vpack.c.b16 %v602, %v600
    %v699 = vpack.c.b16 %v603, %v601
    %v700 = vpack.c.b16 %v606, %v604
    %v701 = vpack.c.b16 %v607, %v605
    %v702 = vpack.c.b16 %v610, %v608
    %v703 = vpack.c.b16 %v611, %v609
    %v704 = vpack.c.b16 %v614, %v612
    %v705 = vpack.c.b16 %v615, %v613
    %v706 = vpack.c.b16 %v618, %v616
    %v707 = vpack.c.b16 %v619, %v617
    %v708 = vpack.c.b16 %v622, %v620
    %v709 = vpack.c.b16 %v623, %v621
    %v710 = vpack.c.b16 %v626, %v624
    %v711 = vpack.c.b16 %v627, %v625
    %v712 = vpack.c.b16 %v630, %v628
    %v713 = vpack.c.b16 %v631, %v629
    %v714 = vpack.c.b16 %v634, %v632
    %v715 = vpack.c.b16 %v635, %v633
    %v716 = vpack.c.b16 %v638, %v636
    %v717 = vpack.c.b16 %v639, %v637
    %v718 = vpack.c.b16 %v642, %v640
    %v719 = vpack.c.b16 %v643, %v641
    %v720 = vpack.c.b16 %v646, %v644
    %v721 = vpack.c.b16 %v647, %v645
    %v722 = vpack.c.b16 %v650, %v648
    %v723 = vpack.c.b16 %v651, %v649
    %v724 = vpack.c.b16 %v654, %v652
    %v725 = vpack.c.b16 %v655, %v653
    %v726 = vpack.c.b16 %v658, %v656
    %v727 = vpack.c.b16 %v659, %v657
    %v728 = vpack.c.b16 %v662, %v660
    %v729 = vpack.c.b16 %v663, %v661
    %v730 = vpack.c.b16 %v666, %v664
    %v731 = vpack.c.b16 %v667, %v665
    %796 = vmatprep.subr.bf16.mxu0 %v669
    %797 = vmatpush1.bf16.msra.mxu0 %v668
    %798 = vmatprep.subr.bf16.mxu0 %v671
    %799 = vmatpush1.bf16.msra.mxu0 %v670
    %800 = vmatprep.subr.bf16.mxu0 %v673
    %801 = vmatpush1.bf16.msra.mxu0 %v672
    %802 = vmatprep.subr.bf16.mxu0 %v675
    %803 = vmatpush1.bf16.msra.mxu0 %v674
    %804 = vmatprep.subr.bf16.mxu0 %v677
    %805 = vmatpush1.bf16.msra.mxu0 %v676
    %806 = vmatprep.subr.bf16.mxu0 %v679
    %807 = vmatpush1.bf16.msra.mxu0 %v678
    %808 = vmatprep.subr.bf16.mxu0 %v681
    %809 = vmatpush1.bf16.msra.mxu0 %v680
    %810 = vmatprep.subr.bf16.mxu0 %v683
    %811 = vmatpush1.bf16.msra.mxu0 %v682
    %812 = vmatprep.subr.bf16.mxu0 %v685
    %813 = vmatpush1.bf16.msra.mxu0 %v684
    %814 = vmatprep.subr.bf16.mxu0 %v687
    %815 = vmatpush1.bf16.msra.mxu0 %v686
    %816 = vmatprep.subr.bf16.mxu0 %v689
    %817 = vmatpush1.bf16.msra.mxu0 %v688
    %818 = vmatprep.subr.bf16.mxu0 %v691
    %819 = vmatpush1.bf16.msra.mxu0 %v690
    %820 = vmatprep.subr.bf16.mxu0 %v693
    %821 = vmatpush1.bf16.msra.mxu0 %v692
    %822 = vmatprep.subr.bf16.mxu0 %v695
    %823 = vmatpush1.bf16.msra.mxu0 %v694
    %824 = vmatprep.subr.bf16.mxu0 %v697
    %825 = vmatpush1.bf16.msra.mxu0 %v696
    %826 = vmatprep.subr.bf16.mxu0 %v699
    %827 = vmatpush1.bf16.msra.mxu0 %v698
    %828 = vmatprep.mubr.bf16.mxu0 %v397
    %829 = vmatmul.mubr.bf16.gmra.mrb[0].mxu0 %v396
    %v830 = vpop.f32.mrb[0].mxu0
    %v831 = vadd.f32 %v469, %v830
    %v832 = vpop.f32.mrb[0].mxu0
    %v833 = vadd.f32 %v473, %v832
    %v834 = vpop.f32.mrb[0].mxu0
    %v835 = vpop.f32.mrb[0].mxu0
    %836 = vdwg.mxu0
    %837 = vmatprep.subr.bf16.mxu0 %v701
    %838 = vmatpush1.bf16.msra.mxu0 %v700
    %839 = vmatprep.subr.bf16.mxu0 %v703
    %840 = vmatpush1.bf16.msra.mxu0 %v702
    %841 = vmatprep.subr.bf16.mxu0 %v705
    %842 = vmatpush1.bf16.msra.mxu0 %v704
    %843 = vmatprep.subr.bf16.mxu0 %v707
    %844 = vmatpush1.bf16.msra.mxu0 %v706
    %845 = vmatprep.subr.bf16.mxu0 %v709
    %846 = vmatpush1.bf16.msra.mxu0 %v708
    %847 = vmatprep.subr.bf16.mxu0 %v711
    %848 = vmatpush1.bf16.msra.mxu0 %v710
    %849 = vmatprep.subr.bf16.mxu0 %v713
    %850 = vmatpush1.bf16.msra.mxu0 %v712
    %851 = vmatprep.subr.bf16.mxu0 %v715
    %852 = vmatpush1.bf16.msra.mxu0 %v714
    %853 = vmatprep.subr.bf16.mxu0 %v717
    %854 = vmatpush1.bf16.msra.mxu0 %v716
    %855 = vmatprep.subr.bf16.mxu0 %v719
    %856 = vmatpush1.bf16.msra.mxu0 %v718
    %857 = vmatprep.subr.bf16.mxu0 %v721
    %858 = vmatpush1.bf16.msra.mxu0 %v720
    %859 = vmatprep.subr.bf16.mxu0 %v723
    %860 = vmatpush1.bf16.msra.mxu0 %v722
    %861 = vmatprep.subr.bf16.mxu0 %v725
    %862 = vmatpush1.bf16.msra.mxu0 %v724
    %863 = vmatprep.subr.bf16.mxu0 %v727
    %864 = vmatpush1.bf16.msra.mxu0 %v726
    %865 = vmatprep.subr.bf16.mxu0 %v729
    %866 = vmatpush1.bf16.msra.mxu0 %v728
    %867 = vmatprep.subr.bf16.mxu0 %v731
    %868 = vmatpush1.bf16.msra.mxu0 %v730
    %869 = vmatprep.mubr.bf16.mxu0 %v399
    %870 = vmatmul.mubr.bf16.gmra.mrb[0].mxu0 %v398
    %v871 = vpop.f32.mrb[0].mxu0
    %v872 = vadd.f32 %v831, %v871
    %v873 = vpop.f32.mrb[0].mxu0
    %v874 = vadd.f32 %v833, %v873
    %v875 = vpop.f32.mrb[0].mxu0
    %v876 = vpop.f32.mrb[0].mxu0
    %877 = vdwg.mxu0
    %v878 = vmax.f32 %v872, 0.0
    %v879 = vmax.f32 %v874, 0.0
    %v880 = vpack.c.bf16 %v878, %v878
    %v881 = vpack.c.bf16 %v879, %v879
    %v882 = vld [vmem:[#allocation8] sm:$0xf]
    %v883 = vld [vmem:[#allocation8 + $0x4] sm:$0xf]
    %v884 = vld [vmem:[#allocation8 + $0x8] sm:$0xf]
    %v885 = vld [vmem:[#allocation8 + $0xc] sm:$0xf]
    %v886 = vld [vmem:[#allocation8 + $0x10] sm:$0xf]
    %v887 = vld [vmem:[#allocation8 + $0x14] sm:$0xf]
    %v888 = vld [vmem:[#allocation8 + $0x18] sm:$0xf]
    %v889 = vld [vmem:[#allocation8 + $0x1c] sm:$0xf]
    %v890 = vld [vmem:[#allocation8 + $0x20] sm:$0xf]
    %v891 = vld [vmem:[#allocation8 + $0x24] sm:$0xf]
    %v892 = vld [vmem:[#allocation8 + $0x28] sm:$0xf]
    %v893 = vld [vmem:[#allocation8 + $0x2c] sm:$0xf]
    %v894 = vld [vmem:[#allocation8 + $0x30] sm:$0xf]
    %v895 = vld [vmem:[#allocation8 + $0x34] sm:$0xf]
    %v896 = vld [vmem:[#allocation8 + $0x38] sm:$0xf]
    %v897 = vld [vmem:[#allocation8 + $0x3c] sm:$0xf]
    %v898 = vld [vmem:[#allocation8 + $0x40] sm:$0xf]
    %v899 = vld [vmem:[#allocation8 + $0x44] sm:$0xf]
    %v900 = vld [vmem:[#allocation8 + $0x48] sm:$0xf]
    %v901 = vld [vmem:[#allocation8 + $0x4c] sm:$0xf]
    %v902 = vld [vmem:[#allocation8 + $0x50] sm:$0xf]
    %v903 = vld [vmem:[#allocation8 + $0x54] sm:$0xf]
    %v904 = vld [vmem:[#allocation8 + $0x58] sm:$0xf]
    %v905 = vld [vmem:[#allocation8 + $0x5c] sm:$0xf]
    %v906 = vld [vmem:[#allocation8 + $0x60] sm:$0xf]
    %v907 = vld [vmem:[#allocation8 + $0x64] sm:$0xf]
    %v908 = vld [vmem:[#allocation8 + $0x68] sm:$0xf]
    %v909 = vld [vmem:[#allocation8 + $0x6c] sm:$0xf]
    %v910 = vld [vmem:[#allocation8 + $0x70] sm:$0xf]
    %v911 = vld [vmem:[#allocation8 + $0x74] sm:$0xf]
    %v912 = vld [vmem:[#allocation8 + $0x78] sm:$0xf]
    %v913 = vld [vmem:[#allocation8 + $0x7c] sm:$0xf]
    %v914 = vld [vmem:[%s6] sm:$0x1]
    %v916 = vlaneseq
    %v917 = vshrl.u32 %v916, 7
    %v918 = vsub.s32 0, %v917
    %v919 = vrot.slane %v914, %v918
    %v953 = vunpack.c.l.b16 %v882
    %v954 = vunpack.c.l.b16 %v883
    %v955 = vunpack.c.l.b16 %v884
    %v956 = vunpack.c.l.b16 %v885
    %v957 = vunpack.c.l.b16 %v886
    %v958 = vunpack.c.l.b16 %v887
    %v959 = vunpack.c.l.b16 %v888
    %v960 = vunpack.c.l.b16 %v889
    %v961 = vunpack.c.l.b16 %v890
    %v962 = vunpack.c.l.b16 %v891
    %v963 = vunpack.c.l.b16 %v892
    %v964 = vunpack.c.l.b16 %v893
    %v965 = vunpack.c.l.b16 %v894
    %v966 = vunpack.c.l.b16 %v895
    %v967 = vunpack.c.l.b16 %v896
    %v968 = vunpack.c.l.b16 %v897
    %v969 = vunpack.c.l.b16 %v898
    %v970 = vunpack.c.l.b16 %v899
    %v971 = vunpack.c.l.b16 %v900
    %v972 = vunpack.c.l.b16 %v901
    %v973 = vunpack.c.l.b16 %v902
    %v974 = vunpack.c.l.b16 %v903
    %v975 = vunpack.c.l.b16 %v904
    %v976 = vunpack.c.l.b16 %v905
    %v977 = vunpack.c.l.b16 %v906
    %v978 = vunpack.c.l.b16 %v907
    %v979 = vunpack.c.l.b16 %v908
    %v980 = vunpack.c.l.b16 %v909
    %v981 = vunpack.c.l.b16 %v910
    %v982 = vunpack.c.l.b16 %v911
    %v983 = vunpack.c.l.b16 %v912
    %v984 = vunpack.c.l.b16 %v913
    %v985 = vpack.c.b16 %v954, %v953
    %v986 = vpack.c.b16 %v956, %v955
    %v987 = vpack.c.b16 %v958, %v957
    %v988 = vpack.c.b16 %v960, %v959
    %v989 = vpack.c.b16 %v962, %v961
    %v990 = vpack.c.b16 %v964, %v963
    %v991 = vpack.c.b16 %v966, %v965
    %v992 = vpack.c.b16 %v968, %v967
    %v993 = vpack.c.b16 %v970, %v969
    %v994 = vpack.c.b16 %v972, %v971
    %v995 = vpack.c.b16 %v974, %v973
    %v996 = vpack.c.b16 %v976, %v975
    %v997 = vpack.c.b16 %v978, %v977
    %v998 = vpack.c.b16 %v980, %v979
    %v999 = vpack.c.b16 %v982, %v981
    %v1000 = vpack.c.b16 %v984, %v983
    %1017 = vmatprep.subr.bf16.mxu0 0
    %1018 = vmatpush1.bf16.msra.mxu0 %v985
    %1019 = vmatprep.subr.bf16.mxu0 0
    %1020 = vmatpush1.bf16.msra.mxu0 %v986
    %1021 = vmatprep.subr.bf16.mxu0 0
    %1022 = vmatpush1.bf16.msra.mxu0 %v987
    %1023 = vmatprep.subr.bf16.mxu0 0
    %1024 = vmatpush1.bf16.msra.mxu0 %v988
    %1025 = vmatprep.subr.bf16.mxu0 0
    %1026 = vmatpush1.bf16.msra.mxu0 %v989
    %1027 = vmatprep.subr.bf16.mxu0 0
    %1028 = vmatpush1.bf16.msra.mxu0 %v990
    %1029 = vmatprep.subr.bf16.mxu0 0
    %1030 = vmatpush1.bf16.msra.mxu0 %v991
    %1031 = vmatprep.subr.bf16.mxu0 0
    %1032 = vmatpush1.bf16.msra.mxu0 %v992
    %1033 = vmatprep.subr.bf16.mxu0 0
    %1034 = vmatpush1.bf16.msra.mxu0 %v993
    %1035 = vmatprep.subr.bf16.mxu0 0
    %1036 = vmatpush1.bf16.msra.mxu0 %v994
    %1037 = vmatprep.subr.bf16.mxu0 0
    %1038 = vmatpush1.bf16.msra.mxu0 %v995
    %1039 = vmatprep.subr.bf16.mxu0 0
    %1040 = vmatpush1.bf16.msra.mxu0 %v996
    %1041 = vmatprep.subr.bf16.mxu0 0
    %1042 = vmatpush1.bf16.msra.mxu0 %v997
    %1043 = vmatprep.subr.bf16.mxu0 0
    %1044 = vmatpush1.bf16.msra.mxu0 %v998
    %1045 = vmatprep.subr.bf16.mxu0 0
    %1046 = vmatpush1.bf16.msra.mxu0 %v999
    %1047 = vmatprep.subr.bf16.mxu0 0
    %1048 = vmatpush1.bf16.msra.mxu0 %v1000
    %1049 = vmatprep.mubr.bf16.mxu0 %v881
    %1050 = vmatmul.mubr.bf16.gmra.mrb[0].mxu0 %v880
    %v1051 = vpop.f32.mrb[0].mxu0
    %v1052 = vadd.f32 %v919, %v1051
    %v1053 = vpop.f32.mrb[0].mxu0
    %v1054 = vpop.f32.mrb[0].mxu0
    %v1055 = vpop.f32.mrb[0].mxu0
    %1056 = vdwg.mxu0
    %1057 = vst [vmem:[#allocation10] sm:$0xff] %v1052
    // Predicated region
    $region46: #{tpu_custom_call.1} parent=1 // pred_check
      _
    $region47: #{tpu_custom_call.1} parent=1 // pred_check_branch
      %1059 = sbr.rel (0) target = $region49
    $region48: #{tpu_custom_call.1} parent=1 // pred_region
      %s1061 = ssub.s32 128, 128
      %1062 = vsyncadd [#allocation4], %s1061
      %s1064 = sshll.u32 [#allocation10], 4
      %s1065 = int_to_ptr.vmem [resolvable:$true] %s1064
      %1067 = dma.vmem_to_hbm [thread:$0]  %s1065, 128, %s7, [#allocation4]
    $region49: #{tpu_custom_call.1} parent=1 // pred_fallthru
      _
    // Predicated region
    $region50: #{tpu_custom_call.1} parent=1 // pred_check
      _
    $region51: #{tpu_custom_call.1} parent=1 // pred_check_branch
      %1069 = sbr.rel (0) target = $region53
    $region52: #{tpu_custom_call.1} parent=1 // pred_region
      %1070 = dma.done [#allocation4], 128
    $region53: #{tpu_custom_call.1} parent=1 // pred_fallthru
      _
    %1071 = vsyncpa [#allocation3], 1
    %1072 = vsyncpa [#allocation6], 1
    %1073 = vsyncpa [#allocation9], 1
    %1074 = vsyncpa [#allocation4], 1

// kernel: tpu_custom_call.1
$region0: #{tpu_custom_call.1}
  #allocation0 [shape = 'u32[]', space=smem, size = 0x4, offset = 0x4, fixed_abs, tag = 'smem constant byte address 0x4 - core index']
  #allocation1 [shape = 'u32[144,128]{1,0:T(1,128)}', space=vmem, size = 0x12000, scoped, tag = 'internal scratch']
  %s0 = inlined_call_operand.hbm [shape: f32[8,128], index: 0, kind: input, shape index: {}]
  %s1 = inlined_call_operand.hbm [shape: bf16[128,512], index: 1, kind: input, shape index: {}]
  %s2 = inlined_call_operand.vmem [shape: f32[1,512], index: 2, kind: input, shape index: {}]
  %s3 = inlined_call_operand.hbm [shape: bf16[512,256], index: 3, kind: input, shape index: {}]
  %s4 = inlined_call_operand.vmem [shape: f32[1,256], index: 4, kind: input, shape index: {}]
  %s5 = inlined_call_operand.hbm [shape: bf16[256,128], index: 5, kind: input, shape index: {}]
  %s6 = inlined_call_operand.vmem [shape: f32[1,128], index: 6, kind: input, shape index: {}]
  %s7 = inlined_call_operand.hbm [shape: f32[8,128], index: 7, kind: output, shape index: {}]
  %s8 = sld [smem:[#allocation0]]
  $region54: #{tpu_custom_call.1} parent=0
    _
  %s10 = ssub.s32 1, %s8
  %s11 = scalar_select 0, %s10, %s8
  $region1: #{tpu_custom_call.1} parent=0
    #allocation2 [shape = 'u8[4096]{0}', space=vmem, size = 0x1000, scoped, tag = 'input window, operand 0, single buffered']
    #allocation3 [shape = 's32[1]{0}', space=sflag, size = 0x4, scoped, tag = 'scoped memory for tpu_custom_call.1']
    #allocation4 [shape = 's32[1]{0}', space=sflag, size = 0x4, scoped, tag = 'scoped memory for tpu_custom_call.1']
    #allocation5 [shape = 'u8[131072]{0}', space=vmem, size = 0x20000, scoped, tag = 'input window, operand 1, single buffered']
    #allocation6 [shape = 's32[1]{0}', space=sflag, size = 0x4, scoped, tag = 'scoped memory for tpu_custom_call.1']
    #allocation7 [shape = 'u8[262144]{0}', space=vmem, size = 0x40000, scoped, tag = 'input window, operand 3, single buffered']
    #allocation8 [shape = 'u8[65536]{0}', space=vmem, size = 0x10000, scoped, tag = 'input window, operand 5, single buffered']
    #allocation9 [shape = 's32[1]{0}', space=sflag, size = 0x4, scoped, tag = 'scoped memory for tpu_custom_call.1']
    #allocation10 [shape = 'u8[4096]{0}', space=vmem, size = 0x1000, scoped, tag = 'output window, operand 0, single buffered']
    %12 = vsyncpa [#allocation3], 0
    %13 = vsyncpa [#allocation6], 0
    %14 = vsyncpa [#allocation9], 0
    %15 = vsyncpa [#allocation4], 0
    // Predicated region
    $region2: #{tpu_custom_call.1} parent=1 // pred_check
      _
    $region3: #{tpu_custom_call.1} parent=1 // pred_check_branch
      %17 = sbr.rel (0) target = $region5
    $region4: #{tpu_custom_call.1} parent=1 // pred_region
      %s19 = ssub.s32 128, 128
      %20 = vsyncadd [#allocation3], %s19
      %s22 = sshll.u32 [#allocation2], 4
      %s23 = int_to_ptr.vmem [resolvable:$true] %s22
      %25 = dma.hbm_to_vmem [thread:$0]  %s0, 128, %s23, [#allocation3]
    $region5: #{tpu_custom_call.1} parent=1 // pred_fallthru
      _
    // Predicated region
    $region6: #{tpu_custom_call.1} parent=1 // pred_check
      _
    $region7: #{tpu_custom_call.1} parent=1 // pred_check_branch
      %27 = sbr.rel (0) target = $region9
    $region8: #{tpu_custom_call.1} parent=1 // pred_region
      %s29 = ssub.s32 4096, 4096
      %30 = vsyncadd [#allocation6], %s29
      %s31 = sshll.u32 [#allocation5], 4
      %s32 = int_to_ptr.vmem [resolvable:$true] %s31
      %37 = dma.hbm_to_vmem [thread:$0]  %s1, 4096, %s32, [#allocation6], 256, 256, 16
    $region9: #{tpu_custom_call.1} parent=1 // pred_fallthru
      _
    // Predicated region
    $region10: #{tpu_custom_call.1} parent=1 // pred_check
      _
    $region11: #{tpu_custom_call.1} parent=1 // pred_check_branch
      %39 = sbr.rel (0) target = $region13
    $region12: #{tpu_custom_call.1} parent=1 // pred_region
      _
    $region13: #{tpu_custom_call.1} parent=1 // pred_fallthru
      _
    // Predicated region
    $region14: #{tpu_custom_call.1} parent=1 // pred_check
      _
    $region15: #{tpu_custom_call.1} parent=1 // pred_check_branch
      %41 = sbr.rel (0) target = $region17
    $region16: #{tpu_custom_call.1} parent=1 // pred_region
      %s43 = ssub.s32 8192, 8192
      %44 = vsyncadd [#allocation6], %s43
      %s45 = sshll.u32 [#allocation7], 4
      %s46 = int_to_ptr.vmem [resolvable:$true] %s45
      %51 = dma.hbm_to_vmem [thread:$0]  %s3, 8192, %s46, [#allocation6], 128, 128, 8
    $region17: #{tpu_custom_call.1} parent=1 // pred_fallthru
      _
    // Predicated region
    $region18: #{tpu_custom_call.1} parent=1 // pred_check
      _
    $region19: #{tpu_custom_call.1} parent=1 // pred_check_branch
      %53 = sbr.rel (0) target = $region21
    $region20: #{tpu_custom_call.1} parent=1 // pred_region
      _
    $region21: #{tpu_custom_call.1} parent=1 // pred_fallthru
      _
    // Predicated region
    $region22: #{tpu_custom_call.1} parent=1 // pred_check
      _
    $region23: #{tpu_custom_call.1} parent=1 // pred_check_branch
      %55 = sbr.rel (0) target = $region25
    $region24: #{tpu_custom_call.1} parent=1 // pred_region
      %s57 = ssub.s32 2048, 2048
      %58 = vsyncadd [#allocation9], %s57
      %s59 = sshll.u32 [#allocation8], 4
      %s60 = int_to_ptr.vmem [resolvable:$true] %s59
      %65 = dma.hbm_to_vmem [thread:$0]  %s5, 2048, %s60, [#allocation9], 64, 64, 4
    $region25: #{tpu_custom_call.1} parent=1 // pred_fallthru
      _
    // Predicated region
    $region26: #{tpu_custom_call.1} parent=1 // pred_check
      _
    $region27: #{tpu_custom_call.1} parent=1 // pred_check_branch
      %67 = sbr.rel (0) target = $region29
    $region28: #{tpu_custom_call.1} parent=1 // pred_region
      _
    $region29: #{tpu_custom_call.1} parent=1 // pred_fallthru
      _
    // Predicated region
    $region30: #{tpu_custom_call.1} parent=1 // pred_check
      _
    $region31: #{tpu_custom_call.1} parent=1 // pred_check_branch
      %69 = sbr.rel (0) target = $region33
    $region32: #{tpu_custom_call.1} parent=1 // pred_region
      %70 = dma.done [#allocation3], 128
    $region33: #{tpu_custom_call.1} parent=1 // pred_fallthru
      _
    // Predicated region
    $region34: #{tpu_custom_call.1} parent=1 // pred_check
      _
    $region35: #{tpu_custom_call.1} parent=1 // pred_check_branch
      %72 = sbr.rel (0) target = $region37
    $region36: #{tpu_custom_call.1} parent=1 // pred_region
      %73 = dma.done [#allocation6], 4096
    $region37: #{tpu_custom_call.1} parent=1 // pred_fallthru
      _
    // Predicated region
    $region38: #{tpu_custom_call.1} parent=1 // pred_check
      _
    $region39: #{tpu_custom_call.1} parent=1 // pred_check_branch
      %75 = sbr.rel (0) target = $region41
    $region40: #{tpu_custom_call.1} parent=1 // pred_region
      %76 = dma.done [#allocation6], 8192
    $region41: #{tpu_custom_call.1} parent=1 // pred_fallthru
      _
    // Predicated region
    $region42: #{tpu_custom_call.1} parent=1 // pred_check
      _
    $region43: #{tpu_custom_call.1} parent=1 // pred_check_branch
      %78 = sbr.rel (0) target = $region45
    $region44: #{tpu_custom_call.1} parent=1 // pred_region
      %79 = dma.done [#allocation9], 2048
    $region45: #{tpu_custom_call.1} parent=1 // pred_fallthru
      _
    %v81 = vld [vmem:[#allocation2] sm:$0xff]
    %82 = vadd.xlane.f32.xlu0 %v81
    %v83 = vpop.xlane.xlu0 %82
    %v84 = vmul.f32 %v83, 0.0078125
    %v85 = vmul.f32 %v81, %v81
    %86 = vadd.xlane.f32.xlu0 %v85
    %v87 = vpop.xlane.xlu0 %86
    %v88 = vmul.f32 %v87, 0.0078125
    %v89 = vmul.f32 %v84, %v84
    %v90 = vsub.f32 %v88, %v89
    %v91 = vsub.f32 %v81, %v84
    %v92 = vadd.f32 %v90, 1e-05
    %v93 = vrsqrt.pop %v92
    %v94 = vmul.f32 %v91, %v93
    %v95 = vpack.c.bf16 %v94, %v94
    %v96 = vld [vmem:[#allocation5] sm:$0xff]
    %v97 = vld [vmem:[#allocation5 + $0x8] sm:$0xff]
    %v98 = vld [vmem:[#allocation5 + $0x10] sm:$0xff]
    %v99 = vld [vmem:[#allocation5 + $0x18] sm:$0xff]
    %v100 = vld [vmem:[#allocation5 + $0x20] sm:$0xff]
    %v101 = vld [vmem:[#allocation5 + $0x28] sm:$0xff]
    %v102 = vld [vmem:[#allocation5 + $0x30] sm:$0xff]
    %v103 = vld [vmem:[#allocation5 + $0x38] sm:$0xff]
    %v104 = vld [vmem:[#allocation5 + $0x40] sm:$0xff]
    %v105 = vld [vmem:[#allocation5 + $0x48] sm:$0xff]
    %v106 = vld [vmem:[#allocation5 + $0x50] sm:$0xff]
    %v107 = vld [vmem:[#allocation5 + $0x58] sm:$0xff]
    %v108 = vld [vmem:[#allocation5 + $0x60] sm:$0xff]
    %v109 = vld [vmem:[#allocation5 + $0x68] sm:$0xff]
    %v110 = vld [vmem:[#allocation5 + $0x70] sm:$0xff]
    %v111 = vld [vmem:[#allocation5 + $0x78] sm:$0xff]
    %v112 = vld [vmem:[#allocation5 + $0x80] sm:$0xff]
    %v113 = vld [vmem:[#allocation5 + $0x88] sm:$0xff]
    %v114 = vld [vmem:[#allocation5 + $0x90] sm:$0xff]
    %v115 = vld [vmem:[#allocation5 + $0x98] sm:$0xff]
    %v116 = vld [vmem:[#allocation5 + $0xa0] sm:$0xff]
    %v117 = vld [vmem:[#allocation5 + $0xa8] sm:$0xff]
    %v118 = vld [vmem:[#allocation5 + $0xb0] sm:$0xff]
    %v119 = vld [vmem:[#allocation5 + $0xb8] sm:$0xff]
    %v120 = vld [vmem:[#allocation5 + $0xc0] sm:$0xff]
    %v121 = vld [vmem:[#allocation5 + $0xc8] sm:$0xff]
    %v122 = vld [vmem:[#allocation5 + $0xd0] sm:$0xff]
    %v123 = vld [vmem:[#allocation5 + $0xd8] sm:$0xff]
    %v124 = vld [vmem:[#allocation5 + $0xe0] sm:$0xff]
    %v125 = vld [vmem:[#allocation5 + $0xe8] sm:$0xff]
    %v126 = vld [vmem:[#allocation5 + $0xf0] sm:$0xff]
    %v127 = vld [vmem:[#allocation5 + $0xf8] sm:$0xff]
    %v128 = vld [vmem:[%s2] sm:$0xf]
    %v130 = vlaneseq
    %v131 = vshrl.u32 %v130, 7
    %v132 = vsub.s32 0, %v131
    %v133 = vrot.slane %v128, %v132
    %v134 = vlaneseq
    %v135 = vshrl.u32 %v134, 7
    %v136 = vsub.s32 1, %v135
    %v137 = vrot.slane %v128, %v136
    %v138 = vlaneseq
    %v139 = vshrl.u32 %v138, 7
    %v140 = vsub.s32 2, %v139
    %v141 = vrot.slane %v128, %v140
    %v142 = vlaneseq
    %v143 = vshrl.u32 %v142, 7
    %v144 = vsub.s32 3, %v143
    %v145 = vrot.slane %v128, %v144
    %v182 = vunpack.c.l.b16 %v96
    %v183 = vunpack.c.h.b16 %v96
    %v184 = vunpack.c.l.b16 %v97
    %v185 = vunpack.c.h.b16 %v97
    %v186 = vunpack.c.l.b16 %v98
    %v187 = vunpack.c.h.b16 %v98
    %v188 = vunpack.c.l.b16 %v99
    %v189 = vunpack.c.h.b16 %v99
    %v190 = vunpack.c.l.b16 %v100
    %v191 = vunpack.c.h.b16 %v100
    %v192 = vunpack.c.l.b16 %v101
    %v193 = vunpack.c.h.b16 %v101
    %v194 = vunpack.c.l.b16 %v102
    %v195 = vunpack.c.h.b16 %v102
    %v196 = vunpack.c.l.b16 %v103
    %v197 = vunpack.c.h.b16 %v103
    %v198 = vunpack.c.l.b16 %v104
    %v199 = vunpack.c.h.b16 %v104
    %v200 = vunpack.c.l.b16 %v105
    %v201 = vunpack.c.h.b16 %v105
    %v202 = vunpack.c.l.b16 %v106
    %v203 = vunpack.c.h.b16 %v106
    %v204 = vunpack.c.l.b16 %v107
    %v205 = vunpack.c.h.b16 %v107
    %v206 = vunpack.c.l.b16 %v108
    %v207 = vunpack.c.h.b16 %v108
    %v208 = vunpack.c.l.b16 %v109
    %v209 = vunpack.c.h.b16 %v109
    %v210 = vunpack.c.l.b16 %v110
    %v211 = vunpack.c.h.b16 %v110
    %v212 = vunpack.c.l.b16 %v111
    %v213 = vunpack.c.h.b16 %v111
    %v214 = vunpack.c.l.b16 %v112
    %v215 = vunpack.c.h.b16 %v112
    %v216 = vunpack.c.l.b16 %v113
    %v217 = vunpack.c.h.b16 %v113
    %v218 = vunpack.c.l.b16 %v114
    %v219 = vunpack.c.h.b16 %v114
    %v220 = vunpack.c.l.b16 %v115
    %v221 = vunpack.c.h.b16 %v115
    %v222 = vunpack.c.l.b16 %v116
    %v223 = vunpack.c.h.b16 %v116
    %v224 = vunpack.c.l.b16 %v117
    %v225 = vunpack.c.h.b16 %v117
    %v226 = vunpack.c.l.b16 %v118
    %v227 = vunpack.c.h.b16 %v118
    %v228 = vunpack.c.l.b16 %v119
    %v229 = vunpack.c.h.b16 %v119
    %v230 = vunpack.c.l.b16 %v120
    %v231 = vunpack.c.h.b16 %v120
    %v232 = vunpack.c.l.b16 %v121
    %v233 = vunpack.c.h.b16 %v121
    %v234 = vunpack.c.l.b16 %v122
    %v235 = vunpack.c.h.b16 %v122
    %v236 = vunpack.c.l.b16 %v123
    %v237 = vunpack.c.h.b16 %v123
    %v238 = vunpack.c.l.b16 %v124
    %v239 = vunpack.c.h.b16 %v124
    %v240 = vunpack.c.l.b16 %v125
    %v241 = vunpack.c.h.b16 %v125
    %v242 = vunpack.c.l.b16 %v126
    %v243 = vunpack.c.h.b16 %v126
    %v244 = vunpack.c.l.b16 %v127
    %v245 = vunpack.c.h.b16 %v127
    %v246 = vpack.c.b16 %v186, %v182
    %v247 = vpack.c.b16 %v187, %v183
    %v248 = vpack.c.b16 %v188, %v184
    %v249 = vpack.c.b16 %v189, %v185
    %v250 = vpack.c.b16 %v194, %v190
    %v251 = vpack.c.b16 %v195, %v191
    %v252 = vpack.c.b16 %v196, %v192
    %v253 = vpack.c.b16 %v197, %v193
    %v254 = vpack.c.b16 %v202, %v198
    %v255 = vpack.c.b16 %v203, %v199
    %v256 = vpack.c.b16 %v204, %v200
    %v257 = vpack.c.b16 %v205, %v201
    %v258 = vpack.c.b16 %v210, %v206
    %v259 = vpack.c.b16 %v211, %v207
    %v260 = vpack.c.b16 %v212, %v208
    %v261 = vpack.c.b16 %v213, %v209
    %v262 = vpack.c.b16 %v218, %v214
    %v263 = vpack.c.b16 %v219, %v215
    %v264 = vpack.c.b16 %v220, %v216
    %v265 = vpack.c.b16 %v221, %v217
    %v266 = vpack.c.b16 %v226, %v222
    %v267 = vpack.c.b16 %v227, %v223
    %v268 = vpack.c.b16 %v228, %v224
    %v269 = vpack.c.b16 %v229, %v225
    %v270 = vpack.c.b16 %v234, %v230
    %v271 = vpack.c.b16 %v235, %v231
    %v272 = vpack.c.b16 %v236, %v232
    %v273 = vpack.c.b16 %v237, %v233
    %v274 = vpack.c.b16 %v242, %v238
    %v275 = vpack.c.b16 %v243, %v239
    %v276 = vpack.c.b16 %v244, %v240
    %v277 = vpack.c.b16 %v245, %v241
    %310 = vmatprep.subr.bf16.mxu0 %v247
    %311 = vmatpush1.bf16.msra.mxu0 %v246
    %312 = vmatprep.subr.bf16.mxu0 %v251
    %313 = vmatpush1.bf16.msra.mxu0 %v250
    %314 = vmatprep.subr.bf16.mxu0 %v255
    %315 = vmatpush1.bf16.msra.mxu0 %v254
    %316 = vmatprep.subr.bf16.mxu0 %v259
    %317 = vmatpush1.bf16.msra.mxu0 %v258
    %318 = vmatprep.subr.bf16.mxu0 %v263
    %319 = vmatpush1.bf16.msra.mxu0 %v262
    %320 = vmatprep.subr.bf16.mxu0 %v267
    %321 = vmatpush1.bf16.msra.mxu0 %v266
    %322 = vmatprep.subr.bf16.mxu0 %v271
    %323 = vmatpush1.bf16.msra.mxu0 %v270
    %324 = vmatprep.subr.bf16.mxu0 %v275
    %325 = vmatpush1.bf16.msra.mxu0 %v274
    %326 = vmatprep.subr.bf16.mxu0 0
    %327 = vmatpush1.bf16.msra.mxu0 0
    %328 = vmatprep.subr.bf16.mxu0 0
    %329 = vmatpush1.bf16.msra.mxu0 0
    %330 = vmatprep.subr.bf16.mxu0 0
    %331 = vmatpush1.bf16.msra.mxu0 0
    %332 = vmatprep.subr.bf16.mxu0 0
    %333 = vmatpush1.bf16.msra.mxu0 0
    %334 = vmatprep.subr.bf16.mxu0 0
    %335 = vmatpush1.bf16.msra.mxu0 0
    %336 = vmatprep.subr.bf16.mxu0 0
    %337 = vmatpush1.bf16.msra.mxu0 0
    %338 = vmatprep.subr.bf16.mxu0 0
    %339 = vmatpush1.bf16.msra.mxu0 0
    %340 = vmatprep.subr.bf16.mxu0 0
    %341 = vmatpush1.bf16.msra.mxu0 0
    %342 = vmatprep.mubr.bf16.mxu0 0
    %343 = vmatmul.mubr.bf16.gmra.mrb[0].mxu0 %v95
    %v344 = vpop.f32.mrb[0].mxu0
    %v345 = vadd.f32 %v133, %v344
    %v346 = vpop.f32.mrb[0].mxu0
    %v347 = vadd.f32 %v137, %v346
    %v348 = vpop.f32.mrb[0].mxu0
    %v349 = vpop.f32.mrb[0].mxu0
    %350 = vdwg.mxu0
    %351 = vmatprep.subr.bf16.mxu0 %v249
    %352 = vmatpush1.bf16.msra.mxu0 %v248
    %353 = vmatprep.subr.bf16.mxu0 %v253
    %354 = vmatpush1.bf16.msra.mxu0 %v252
    %355 = vmatprep.subr.bf16.mxu0 %v257
    %356 = vmatpush1.bf16.msra.mxu0 %v256
    %357 = vmatprep.subr.bf16.mxu0 %v261
    %358 = vmatpush1.bf16.msra.mxu0 %v260
    %359 = vmatprep.subr.bf16.mxu0 %v265
    %360 = vmatpush1.bf16.msra.mxu0 %v264
    %361 = vmatprep.subr.bf16.mxu0 %v269
    %362 = vmatpush1.bf16.msra.mxu0 %v268
    %363 = vmatprep.subr.bf16.mxu0 %v273
    %364 = vmatpush1.bf16.msra.mxu0 %v272
    %365 = vmatprep.subr.bf16.mxu0 %v277
    %366 = vmatpush1.bf16.msra.mxu0 %v276
    %367 = vmatprep.subr.bf16.mxu0 0
    %368 = vmatpush1.bf16.msra.mxu0 0
    %369 = vmatprep.subr.bf16.mxu0 0
    %370 = vmatpush1.bf16.msra.mxu0 0
    %371 = vmatprep.subr.bf16.mxu0 0
    %372 = vmatpush1.bf16.msra.mxu0 0
    %373 = vmatprep.subr.bf16.mxu0 0
    %374 = vmatpush1.bf16.msra.mxu0 0
    %375 = vmatprep.subr.bf16.mxu0 0
    %376 = vmatpush1.bf16.msra.mxu0 0
    %377 = vmatprep.subr.bf16.mxu0 0
    %378 = vmatpush1.bf16.msra.mxu0 0
    %379 = vmatprep.subr.bf16.mxu0 0
    %380 = vmatpush1.bf16.msra.mxu0 0
    %381 = vmatprep.subr.bf16.mxu0 0
    %382 = vmatpush1.bf16.msra.mxu0 0
    %383 = vmatprep.mubr.bf16.mxu0 0
    %384 = vmatmul.mubr.bf16.gmra.mrb[0].mxu0 %v95
    %v385 = vpop.f32.mrb[0].mxu0
    %v386 = vadd.f32 %v141, %v385
    %v387 = vpop.f32.mrb[0].mxu0
    %v388 = vadd.f32 %v145, %v387
    %v389 = vpop.f32.mrb[0].mxu0
    %v390 = vpop.f32.mrb[0].mxu0
    %391 = vdwg.mxu0
    %v392 = vmax.f32 %v345, 0.0
    %v393 = vmax.f32 %v347, 0.0
    %v394 = vmax.f32 %v386, 0.0
    %v395 = vmax.f32 %v388, 0.0
    %v396 = vpack.c.bf16 %v392, %v392
    %v397 = vpack.c.bf16 %v393, %v393
    %v398 = vpack.c.bf16 %v394, %v394
    %v399 = vpack.c.bf16 %v395, %v395
    %v400 = vld [vmem:[#allocation7] sm:$0xff]
    %v401 = vld [vmem:[#allocation7 + $0x8] sm:$0xff]
    %v402 = vld [vmem:[#allocation7 + $0x10] sm:$0xff]
    %v403 = vld [vmem:[#allocation7 + $0x18] sm:$0xff]
    %v404 = vld [vmem:[#allocation7 + $0x20] sm:$0xff]
    %v405 = vld [vmem:[#allocation7 + $0x28] sm:$0xff]
    %v406 = vld [vmem:[#allocation7 + $0x30] sm:$0xff]
    %v407 = vld [vmem:[#allocation7 + $0x38] sm:$0xff]
    %v408 = vld [vmem:[#allocation7 + $0x40] sm:$0xff]
    %v409 = vld [vmem:[#allocation7 + $0x48] sm:$0xff]
    %v410 = vld [vmem:[#allocation7 + $0x50] sm:$0xff]
    %v411 = vld [vmem:[#allocation7 + $0x58] sm:$0xff]
    %v412 = vld [vmem:[#allocation7 + $0x60] sm:$0xff]
    %v413 = vld [vmem:[#allocation7 + $0x68] sm:$0xff]
    %v414 = vld [vmem:[#allocation7 + $0x70] sm:$0xff]
    %v415 = vld [vmem:[#allocation7 + $0x78] sm:$0xff]
    %v416 = vld [vmem:[#allocation7 + $0x80] sm:$0xff]
    %v417 = vld [vmem:[#allocation7 + $0x88] sm:$0xff]
    %v418 = vld [vmem:[#allocation7 + $0x90] sm:$0xff]
    %v419 = vld [vmem:[#allocation7 + $0x98] sm:$0xff]
    %v420 = vld [vmem:[#allocation7 + $0xa0] sm:$0xff]
    %v421 = vld [vmem:[#allocation7 + $0xa8] sm:$0xff]
    %v422 = vld [vmem:[#allocation7 + $0xb0] sm:$0xff]
    %v423 = vld [vmem:[#allocation7 + $0xb8] sm:$0xff]
    %v424 = vld [vmem:[#allocation7 + $0xc0] sm:$0xff]
    %v425 = vld [vmem:[#allocation7 + $0xc8] sm:$0xff]
    %v426 = vld [vmem:[#allocation7 + $0xd0] sm:$0xff]
    %v427 = vld [vmem:[#allocation7 + $0xd8] sm:$0xff]
    %v428 = vld [vmem:[#allocation7 + $0xe0] sm:$0xff]
    %v429 = vld [vmem:[#allocation7 + $0xe8] sm:$0xff]
    %v430 = vld [vmem:[#allocation7 + $0xf0] sm:$0xff]
    %v431 = vld [vmem:[#allocation7 + $0xf8] sm:$0xff]
    %v432 = vld [vmem:[#allocation7 + $0x100] sm:$0xff]
    %v433 = vld [vmem:[#allocation7 + $0x108] sm:$0xff]
    %v434 = vld [vmem:[#allocation7 + $0x110] sm:$0xff]
    %v435 = vld [vmem:[#allocation7 + $0x118] sm:$0xff]
    %v436 = vld [vmem:[#allocation7 + $0x120] sm:$0xff]
    %v437 = vld [vmem:[#allocation7 + $0x128] sm:$0xff]
    %v438 = vld [vmem:[#allocation7 + $0x130] sm:$0xff]
    %v439 = vld [vmem:[#allocation7 + $0x138] sm:$0xff]
    %v440 = vld [vmem:[#allocation7 + $0x140] sm:$0xff]
    %v441 = vld [vmem:[#allocation7 + $0x148] sm:$0xff]
    %v442 = vld [vmem:[#allocation7 + $0x150] sm:$0xff]
    %v443 = vld [vmem:[#allocation7 + $0x158] sm:$0xff]
    %v444 = vld [vmem:[#allocation7 + $0x160] sm:$0xff]
    %v445 = vld [vmem:[#allocation7 + $0x168] sm:$0xff]
    %v446 = vld [vmem:[#allocation7 + $0x170] sm:$0xff]
    %v447 = vld [vmem:[#allocation7 + $0x178] sm:$0xff]
    %v448 = vld [vmem:[#allocation7 + $0x180] sm:$0xff]
    %v449 = vld [vmem:[#allocation7 + $0x188] sm:$0xff]
    %v450 = vld [vmem:[#allocation7 + $0x190] sm:$0xff]
    %v451 = vld [vmem:[#allocation7 + $0x198] sm:$0xff]
    %v452 = vld [vmem:[#allocation7 + $0x1a0] sm:$0xff]
    %v453 = vld [vmem:[#allocation7 + $0x1a8] sm:$0xff]
    %v454 = vld [vmem:[#allocation7 + $0x1b0] sm:$0xff]
    %v455 = vld [vmem:[#allocation7 + $0x1b8] sm:$0xff]
    %v456 = vld [vmem:[#allocation7 + $0x1c0] sm:$0xff]
    %v457 = vld [vmem:[#allocation7 + $0x1c8] sm:$0xff]
    %v458 = vld [vmem:[#allocation7 + $0x1d0] sm:$0xff]
    %v459 = vld [vmem:[#allocation7 + $0x1d8] sm:$0xff]
    %v460 = vld [vmem:[#allocation7 + $0x1e0] sm:$0xff]
    %v461 = vld [vmem:[#allocation7 + $0x1e8] sm:$0xff]
    %v462 = vld [vmem:[#allocation7 + $0x1f0] sm:$0xff]
    %v463 = vld [vmem:[#allocation7 + $0x1f8] sm:$0xff]
    %v464 = vld [vmem:[%s4] sm:$0x3]
    %v466 = vlaneseq
    %v467 = vshrl.u32 %v466, 7
    %v468 = vsub.s32 0, %v467
    %v469 = vrot.slane %v464, %v468
    %v470 = vlaneseq
    %v471 = vshrl.u32 %v470, 7
    %v472 = vsub.s32 1, %v471
    %v473 = vrot.slane %v464, %v472
    %v540 = vunpack.c.l.b16 %v400
    %v541 = vunpack.c.h.b16 %v400
    %v542 = vunpack.c.l.b16 %v401
    %v543 = vunpack.c.h.b16 %v401
    %v544 = vunpack.c.l.b16 %v402
    %v545 = vunpack.c.h.b16 %v402
    %v546 = vunpack.c.l.b16 %v403
    %v547 = vunpack.c.h.b16 %v403
    %v548 = vunpack.c.l.b16 %v404
    %v549 = vunpack.c.h.b16 %v404
    %v550 = vunpack.c.l.b16 %v405
    %v551 = vunpack.c.h.b16 %v405
    %v552 = vunpack.c.l.b16 %v406
    %v553 = vunpack.c.h.b16 %v406
    %v554 = vunpack.c.l.b16 %v407
    %v555 = vunpack.c.h.b16 %v407
    %v556 = vunpack.c.l.b16 %v408
    %v557 = vunpack.c.h.b16 %v408
    %v558 = vunpack.c.l.b16 %v409
    %v559 = vunpack.c.h.b16 %v409
    %v560 = vunpack.c.l.b16 %v410
    %v561 = vunpack.c.h.b16 %v410
    %v562 = vunpack.c.l.b16 %v411
    %v563 = vunpack.c.h.b16 %v411
    %v564 = vunpack.c.l.b16 %v412
    %v565 = vunpack.c.h.b16 %v412
    %v566 = vunpack.c.l.b16 %v413
    %v567 = vunpack.c.h.b16 %v413
    %v568 = vunpack.c.l.b16 %v414
    %v569 = vunpack.c.h.b16 %v414
    %v570 = vunpack.c.l.b16 %v415
    %v571 = vunpack.c.h.b16 %v415
    %v572 = vunpack.c.l.b16 %v416
    %v573 = vunpack.c.h.b16 %v416
    %v574 = vunpack.c.l.b16 %v417
    %v575 = vunpack.c.h.b16 %v417
    %v576 = vunpack.c.l.b16 %v418
    %v577 = vunpack.c.h.b16 %v418
    %v578 = vunpack.c.l.b16 %v419
    %v579 = vunpack.c.h.b16 %v419
    %v580 = vunpack.c.l.b16 %v420
    %v581 = vunpack.c.h.b16 %v420
    %v582 = vunpack.c.l.b16 %v421
    %v583 = vunpack.c.h.b16 %v421
    %v584 = vunpack.c.l.b16 %v422
    %v585 = vunpack.c.h.b16 %v422
    %v586 = vunpack.c.l.b16 %v423
    %v587 = vunpack.c.h.b16 %v423
    %v588 = vunpack.c.l.b16 %v424
    %v589 = vunpack.c.h.b16 %v424
    %v590 = vunpack.c.l.b16 %v425
    %v591 = vunpack.c.h.b16 %v425
    %v592 = vunpack.c.l.b16 %v426
    %v593 = vunpack.c.h.b16 %v426
    %v594 = vunpack.c.l.b16 %v427
    %v595 = vunpack.c.h.b16 %v427
    %v596 = vunpack.c.l.b16 %v428
    %v597 = vunpack.c.h.b16 %v428
    %v598 = vunpack.c.l.b16 %v429
    %v599 = vunpack.c.h.b16 %v429
    %v600 = vunpack.c.l.b16 %v430
    %v601 = vunpack.c.h.b16 %v430
    %v602 = vunpack.c.l.b16 %v431
    %v603 = vunpack.c.h.b16 %v431
    %v604 = vunpack.c.l.b16 %v432
    %v605 = vunpack.c.h.b16 %v432
    %v606 = vunpack.c.l.b16 %v433
    %v607 = vunpack.c.h.b16 %v433
    %v608 = vunpack.c.l.b16 %v434
    %v609 = vunpack.c.h.b16 %v434
    %v610 = vunpack.c.l.b16 %v435
    %v611 = vunpack.c.h.b16 %v435
    %v612 = vunpack.c.l.b16 %v436
    %v613 = vunpack.c.h.b16 %v436
    %v614 = vunpack.c.l.b16 %v437
    %v615 = vunpack.c.h.b16 %v437
    %v616 = vunpack.c.l.b16 %v438
    %v617 = vunpack.c.h.b16 %v438
    %v618 = vunpack.c.l.b16 %v439
    %v619 = vunpack.c.h.b16 %v439
    %v620 = vunpack.c.l.b16 %v440
    %v621 = vunpack.c.h.b16 %v440
    %v622 = vunpack.c.l.b16 %v441
    %v623 = vunpack.c.h.b16 %v441
    %v624 = vunpack.c.l.b16 %v442
    %v625 = vunpack.c.h.b16 %v442
    %v626 = vunpack.c.l.b16 %v443
    %v627 = vunpack.c.h.b16 %v443
    %v628 = vunpack.c.l.b16 %v444
    %v629 = vunpack.c.h.b16 %v444
    %v630 = vunpack.c.l.b16 %v445
    %v631 = vunpack.c.h.b16 %v445
    %v632 = vunpack.c.l.b16 %v446
    %v633 = vunpack.c.h.b16 %v446
    %v634 = vunpack.c.l.b16 %v447
    %v635 = vunpack.c.h.b16 %v447
    %v636 = vunpack.c.l.b16 %v448
    %v637 = vunpack.c.h.b16 %v448
    %v638 = vunpack.c.l.b16 %v449
    %v639 = vunpack.c.h.b16 %v449
    %v640 = vunpack.c.l.b16 %v450
    %v641 = vunpack.c.h.b16 %v450
    %v642 = vunpack.c.l.b16 %v451
    %v643 = vunpack.c.h.b16 %v451
    %v644 = vunpack.c.l.b16 %v452
    %v645 = vunpack.c.h.b16 %v452
    %v646 = vunpack.c.l.b16 %v453
    %v647 = vunpack.c.h.b16 %v453
    %v648 = vunpack.c.l.b16 %v454
    %v649 = vunpack.c.h.b16 %v454
    %v650 = vunpack.c.l.b16 %v455
    %v651 = vunpack.c.h.b16 %v455
    %v652 = vunpack.c.l.b16 %v456
    %v653 = vunpack.c.h.b16 %v456
    %v654 = vunpack.c.l.b16 %v457
    %v655 = vunpack.c.h.b16 %v457
    %v656 = vunpack.c.l.b16 %v458
    %v657 = vunpack.c.h.b16 %v458
    %v658 = vunpack.c.l.b16 %v459
    %v659 = vunpack.c.h.b16 %v459
    %v660 = vunpack.c.l.b16 %v460
    %v661 = vunpack.c.h.b16 %v460
    %v662 = vunpack.c.l.b16 %v461
    %v663 = vunpack.c.h.b16 %v461
    %v664 = vunpack.c.l.b16 %v462
    %v665 = vunpack.c.h.b16 %v462
    %v666 = vunpack.c.l.b16 %v463
    %v667 = vunpack.c.h.b16 %v463
    %v668 = vpack.c.b16 %v542, %v540
    %v669 = vpack.c.b16 %v543, %v541
    %v670 = vpack.c.b16 %v546, %v544
    %v671 = vpack.c.b16 %v547, %v545
    %v672 = vpack.c.b16 %v550, %v548
    %v673 = vpack.c.b16 %v551, %v549
    %v674 = vpack.c.b16 %v554, %v552
    %v675 = vpack.c.b16 %v555, %v553
    %v676 = vpack.c.b16 %v558, %v556
    %v677 = vpack.c.b16 %v559, %v557
    %v678 = vpack.c.b16 %v562, %v560
    %v679 = vpack.c.b16 %v563, %v561
    %v680 = vpack.c.b16 %v566, %v564
    %v681 = vpack.c.b16 %v567, %v565
    %v682 = vpack.c.b16 %v570, %v568
    %v683 = vpack.c.b16 %v571, %v569
    %v684 = vpack.c.b16 %v574, %v572
    %v685 = vpack.c.b16 %v575, %v573
    %v686 = vpack.c.b16 %v578, %v576
    %v687 = vpack.c.b16 %v579, %v577
    %v688 = vpack.c.b16 %v582, %v580
    %v689 = vpack.c.b16 %v583, %v581
    %v690 = vpack.c.b16 %v586, %v584
    %v691 = vpack.c.b16 %v587, %v585
    %v692 = vpack.c.b16 %v590, %v588
    %v693 = vpack.c.b16 %v591, %v589
    %v694 = vpack.c.b16 %v594, %v592
    %v695 = vpack.c.b16 %v595, %v593
    %v696 = vpack.c.b16 %v598, %v596
    %v697 = vpack.c.b16 %v599, %v597
    %v698 = vpack.c.b16 %v602, %v600
    %v699 = vpack.c.b16 %v603, %v601
    %v700 = vpack.c.b16 %v606, %v604
    %v701 = vpack.c.b16 %v607, %v605
    %v702 = vpack.c.b16 %v610, %v608
    %v703 = vpack.c.b16 %v611, %v609
    %v704 = vpack.c.b16 %v614, %v612
    %v705 = vpack.c.b16 %v615, %v613
    %v706 = vpack.c.b16 %v618, %v616
    %v707 = vpack.c.b16 %v619, %v617
    %v708 = vpack.c.b16 %v622, %v620
    %v709 = vpack.c.b16 %v623, %v621
    %v710 = vpack.c.b16 %v626, %v624
    %v711 = vpack.c.b16 %v627, %v625
    %v712 = vpack.c.b16 %v630, %v628
    %v713 = vpack.c.b16 %v631, %v629
    %v714 = vpack.c.b16 %v634, %v632
    %v715 = vpack.c.b16 %v635, %v633
    %v716 = vpack.c.b16 %v638, %v636
    %v717 = vpack.c.b16 %v639, %v637
    %v718 = vpack.c.b16 %v642, %v640
    %v719 = vpack.c.b16 %v643, %v641
    %v720 = vpack.c.b16 %v646, %v644
    %v721 = vpack.c.b16 %v647, %v645
    %v722 = vpack.c.b16 %v650, %v648
    %v723 = vpack.c.b16 %v651, %v649
    %v724 = vpack.c.b16 %v654, %v652
    %v725 = vpack.c.b16 %v655, %v653
    %v726 = vpack.c.b16 %v658, %v656
    %v727 = vpack.c.b16 %v659, %v657
    %v728 = vpack.c.b16 %v662, %v660
    %v729 = vpack.c.b16 %v663, %v661
    %v730 = vpack.c.b16 %v666, %v664
    %v731 = vpack.c.b16 %v667, %v665
    %796 = vmatprep.subr.bf16.mxu0 %v669
    %797 = vmatpush1.bf16.msra.mxu0 %v668
    %798 = vmatprep.subr.bf16.mxu0 %v671
    %799 = vmatpush1.bf16.msra.mxu0 %v670
    %800 = vmatprep.subr.bf16.mxu0 %v673
    %801 = vmatpush1.bf16.msra.mxu0 %v672
    %802 = vmatprep.subr.bf16.mxu0 %v675
    %803 = vmatpush1.bf16.msra.mxu0 %v674
    %804 = vmatprep.subr.bf16.mxu0 %v677
    %805 = vmatpush1.bf16.msra.mxu0 %v676
    %806 = vmatprep.subr.bf16.mxu0 %v679
    %807 = vmatpush1.bf16.msra.mxu0 %v678
    %808 = vmatprep.subr.bf16.mxu0 %v681
    %809 = vmatpush1.bf16.msra.mxu0 %v680
    %810 = vmatprep.subr.bf16.mxu0 %v683
    %811 = vmatpush1.bf16.msra.mxu0 %v682
    %812 = vmatprep.subr.bf16.mxu0 %v685
    %813 = vmatpush1.bf16.msra.mxu0 %v684
    %814 = vmatprep.subr.bf16.mxu0 %v687
    %815 = vmatpush1.bf16.msra.mxu0 %v686
    %816 = vmatprep.subr.bf16.mxu0 %v689
    %817 = vmatpush1.bf16.msra.mxu0 %v688
    %818 = vmatprep.subr.bf16.mxu0 %v691
    %819 = vmatpush1.bf16.msra.mxu0 %v690
    %820 = vmatprep.subr.bf16.mxu0 %v693
    %821 = vmatpush1.bf16.msra.mxu0 %v692
    %822 = vmatprep.subr.bf16.mxu0 %v695
    %823 = vmatpush1.bf16.msra.mxu0 %v694
    %824 = vmatprep.subr.bf16.mxu0 %v697
    %825 = vmatpush1.bf16.msra.mxu0 %v696
    %826 = vmatprep.subr.bf16.mxu0 %v699
    %827 = vmatpush1.bf16.msra.mxu0 %v698
    %828 = vmatprep.mubr.bf16.mxu0 %v397
    %829 = vmatmul.mubr.bf16.gmra.mrb[0].mxu0 %v396
    %v830 = vpop.f32.mrb[0].mxu0
    %v831 = vadd.f32 %v469, %v830
    %v832 = vpop.f32.mrb[0].mxu0
    %v833 = vadd.f32 %v473, %v832
    %v834 = vpop.f32.mrb[0].mxu0
    %v835 = vpop.f32.mrb[0].mxu0
    %836 = vdwg.mxu0
    %837 = vmatprep.subr.bf16.mxu0 %v701
    %838 = vmatpush1.bf16.msra.mxu0 %v700
    %839 = vmatprep.subr.bf16.mxu0 %v703
    %840 = vmatpush1.bf16.msra.mxu0 %v702
    %841 = vmatprep.subr.bf16.mxu0 %v705
    %842 = vmatpush1.bf16.msra.mxu0 %v704
    %843 = vmatprep.subr.bf16.mxu0 %v707
    %844 = vmatpush1.bf16.msra.mxu0 %v706
    %845 = vmatprep.subr.bf16.mxu0 %v709
    %846 = vmatpush1.bf16.msra.mxu0 %v708
    %847 = vmatprep.subr.bf16.mxu0 %v711
    %848 = vmatpush1.bf16.msra.mxu0 %v710
    %849 = vmatprep.subr.bf16.mxu0 %v713
    %850 = vmatpush1.bf16.msra.mxu0 %v712
    %851 = vmatprep.subr.bf16.mxu0 %v715
    %852 = vmatpush1.bf16.msra.mxu0 %v714
    %853 = vmatprep.subr.bf16.mxu0 %v717
    %854 = vmatpush1.bf16.msra.mxu0 %v716
    %855 = vmatprep.subr.bf16.mxu0 %v719
    %856 = vmatpush1.bf16.msra.mxu0 %v718
    %857 = vmatprep.subr.bf16.mxu0 %v721
    %858 = vmatpush1.bf16.msra.mxu0 %v720
    %859 = vmatprep.subr.bf16.mxu0 %v723
    %860 = vmatpush1.bf16.msra.mxu0 %v722
    %861 = vmatprep.subr.bf16.mxu0 %v725
    %862 = vmatpush1.bf16.msra.mxu0 %v724
    %863 = vmatprep.subr.bf16.mxu0 %v727
    %864 = vmatpush1.bf16.msra.mxu0 %v726
    %865 = vmatprep.subr.bf16.mxu0 %v729
    %866 = vmatpush1.bf16.msra.mxu0 %v728
    %867 = vmatprep.subr.bf16.mxu0 %v731
    %868 = vmatpush1.bf16.msra.mxu0 %v730
    %869 = vmatprep.mubr.bf16.mxu0 %v399
    %870 = vmatmul.mubr.bf16.gmra.mrb[0].mxu0 %v398
    %v871 = vpop.f32.mrb[0].mxu0
    %v872 = vadd.f32 %v831, %v871
    %v873 = vpop.f32.mrb[0].mxu0
    %v874 = vadd.f32 %v833, %v873
    %v875 = vpop.f32.mrb[0].mxu0
    %v876 = vpop.f32.mrb[0].mxu0
    %877 = vdwg.mxu0
    %v878 = vmax.f32 %v872, 0.0
    %v879 = vmax.f32 %v874, 0.0
    %v880 = vpack.c.bf16 %v878, %v878
    %v881 = vpack.c.bf16 %v879, %v879
    %v882 = vld [vmem:[#allocation8] sm:$0xf]
    %v883 = vld [vmem:[#allocation8 + $0x4] sm:$0xf]
    %v884 = vld [vmem:[#allocation8 + $0x8] sm:$0xf]
    %v885 = vld [vmem:[#allocation8 + $0xc] sm:$0xf]
    %v886 = vld [vmem:[#allocation8 + $0x10] sm:$0xf]
    %v887 = vld [vmem:[#allocation8 + $0x14] sm:$0xf]
    %v888 = vld [vmem:[#allocation8 + $0x18] sm:$0xf]
    %v889 = vld [vmem:[#allocation8 + $0x1c] sm:$0xf]
    %v890 = vld [vmem:[#allocation8 + $0x20] sm:$0xf]
    %v891 = vld [vmem:[#allocation8 + $0x24] sm:$0xf]
    %v892 = vld [vmem:[#allocation8 + $0x28] sm:$0xf]
    %v893 = vld [vmem:[#allocation8 + $0x2c] sm:$0xf]
    %v894 = vld [vmem:[#allocation8 + $0x30] sm:$0xf]
    %v895 = vld [vmem:[#allocation8 + $0x34] sm:$0xf]
    %v896 = vld [vmem:[#allocation8 + $0x38] sm:$0xf]
    %v897 = vld [vmem:[#allocation8 + $0x3c] sm:$0xf]
    %v898 = vld [vmem:[#allocation8 + $0x40] sm:$0xf]
    %v899 = vld [vmem:[#allocation8 + $0x44] sm:$0xf]
    %v900 = vld [vmem:[#allocation8 + $0x48] sm:$0xf]
    %v901 = vld [vmem:[#allocation8 + $0x4c] sm:$0xf]
    %v902 = vld [vmem:[#allocation8 + $0x50] sm:$0xf]
    %v903 = vld [vmem:[#allocation8 + $0x54] sm:$0xf]
    %v904 = vld [vmem:[#allocation8 + $0x58] sm:$0xf]
    %v905 = vld [vmem:[#allocation8 + $0x5c] sm:$0xf]
    %v906 = vld [vmem:[#allocation8 + $0x60] sm:$0xf]
    %v907 = vld [vmem:[#allocation8 + $0x64] sm:$0xf]
    %v908 = vld [vmem:[#allocation8 + $0x68] sm:$0xf]
    %v909 = vld [vmem:[#allocation8 + $0x6c] sm:$0xf]
    %v910 = vld [vmem:[#allocation8 + $0x70] sm:$0xf]
    %v911 = vld [vmem:[#allocation8 + $0x74] sm:$0xf]
    %v912 = vld [vmem:[#allocation8 + $0x78] sm:$0xf]
    %v913 = vld [vmem:[#allocation8 + $0x7c] sm:$0xf]
    %v914 = vld [vmem:[%s6] sm:$0x1]
    %v916 = vlaneseq
    %v917 = vshrl.u32 %v916, 7
    %v918 = vsub.s32 0, %v917
    %v919 = vrot.slane %v914, %v918
    %v953 = vunpack.c.l.b16 %v882
    %v954 = vunpack.c.l.b16 %v883
    %v955 = vunpack.c.l.b16 %v884
    %v956 = vunpack.c.l.b16 %v885
    %v957 = vunpack.c.l.b16 %v886
    %v958 = vunpack.c.l.b16 %v887
    %v959 = vunpack.c.l.b16 %v888
    %v960 = vunpack.c.l.b16 %v889
    %v961 = vunpack.c.l.b16 %v890
    %v962 = vunpack.c.l.b16 %v891
    %v963 = vunpack.c.l.b16 %v892
    %v964 = vunpack.c.l.b16 %v893
    %v965 = vunpack.c.l.b16 %v894
    %v966 = vunpack.c.l.b16 %v895
    %v967 = vunpack.c.l.b16 %v896
    %v968 = vunpack.c.l.b16 %v897
    %v969 = vunpack.c.l.b16 %v898
    %v970 = vunpack.c.l.b16 %v899
    %v971 = vunpack.c.l.b16 %v900
    %v972 = vunpack.c.l.b16 %v901
    %v973 = vunpack.c.l.b16 %v902
    %v974 = vunpack.c.l.b16 %v903
    %v975 = vunpack.c.l.b16 %v904
    %v976 = vunpack.c.l.b16 %v905
    %v977 = vunpack.c.l.b16 %v906
    %v978 = vunpack.c.l.b16 %v907
    %v979 = vunpack.c.l.b16 %v908
    %v980 = vunpack.c.l.b16 %v909
    %v981 = vunpack.c.l.b16 %v910
    %v982 = vunpack.c.l.b16 %v911
    %v983 = vunpack.c.l.b16 %v912
    %v984 = vunpack.c.l.b16 %v913
    %v985 = vpack.c.b16 %v954, %v953
    %v986 = vpack.c.b16 %v956, %v955
    %v987 = vpack.c.b16 %v958, %v957
    %v988 = vpack.c.b16 %v960, %v959
    %v989 = vpack.c.b16 %v962, %v961
    %v990 = vpack.c.b16 %v964, %v963
    %v991 = vpack.c.b16 %v966, %v965
    %v992 = vpack.c.b16 %v968, %v967
    %v993 = vpack.c.b16 %v970, %v969
    %v994 = vpack.c.b16 %v972, %v971
    %v995 = vpack.c.b16 %v974, %v973
    %v996 = vpack.c.b16 %v976, %v975
    %v997 = vpack.c.b16 %v978, %v977
    %v998 = vpack.c.b16 %v980, %v979
    %v999 = vpack.c.b16 %v982, %v981
    %v1000 = vpack.c.b16 %v984, %v983
    %1017 = vmatprep.subr.bf16.mxu0 0
    %1018 = vmatpush1.bf16.msra.mxu0 %v985
    %1019 = vmatprep.subr.bf16.mxu0 0
    %1020 = vmatpush1.bf16.msra.mxu0 %v986
    %1021 = vmatprep.subr.bf16.mxu0 0
    %1022 = vmatpush1.bf16.msra.mxu0 %v987
    %1023 = vmatprep.subr.bf16.mxu0 0
    %1024 = vmatpush1.bf16.msra.mxu0 %v988
    %1025 = vmatprep.subr.bf16.mxu0 0
    %1026 = vmatpush1.bf16.msra.mxu0 %v989
    %1027 = vmatprep.subr.bf16.mxu0 0
    %1028 = vmatpush1.bf16.msra.mxu0 %v990
    %1029 = vmatprep.subr.bf16.mxu0 0
    %1030 = vmatpush1.bf16.msra.mxu0 %v991
    %1031 = vmatprep.subr.bf16.mxu0 0
    %1032 = vmatpush1.bf16.msra.mxu0 %v992
    %1033 = vmatprep.subr.bf16.mxu0 0
    %1034 = vmatpush1.bf16.msra.mxu0 %v993
    %1035 = vmatprep.subr.bf16.mxu0 0
    %1036 = vmatpush1.bf16.msra.mxu0 %v994
    %1037 = vmatprep.subr.bf16.mxu0 0
    %1038 = vmatpush1.bf16.msra.mxu0 %v995
    %1039 = vmatprep.subr.bf16.mxu0 0
    %1040 = vmatpush1.bf16.msra.mxu0 %v996
    %1041 = vmatprep.subr.bf16.mxu0 0
    %1042 = vmatpush1.bf16.msra.mxu0 %v997
    %1043 = vmatprep.subr.bf16.mxu0 0
    %1044 = vmatpush1.bf16.msra.mxu0 %v998
    %1045 = vmatprep.subr.bf16.mxu0 0
    %1046 = vmatpush1.bf16.msra.mxu0 %v999
    %1047 = vmatprep.subr.bf16.mxu0 0
    %1048 = vmatpush1.bf16.msra.mxu0 %v1000
    %1049 = vmatprep.mubr.bf16.mxu0 %v881
    %1050 = vmatmul.mubr.bf16.gmra.mrb[0].mxu0 %v880
    %v1051 = vpop.f32.mrb[0].mxu0
    %v1052 = vadd.f32 %v919, %v1051
    %v1053 = vpop.f32.mrb[0].mxu0
    %v1054 = vpop.f32.mrb[0].mxu0
    %v1055 = vpop.f32.mrb[0].mxu0
    %1056 = vdwg.mxu0
    %1057 = vst [vmem:[#allocation10] sm:$0xff] %v1052
    // Predicated region
    $region46: #{tpu_custom_call.1} parent=1 // pred_check
      _
    $region47: #{tpu_custom_call.1} parent=1 // pred_check_branch
      %1059 = sbr.rel (0) target = $region49
    $region48: #{tpu_custom_call.1} parent=1 // pred_region
      %s1061 = ssub.s32 128, 128
      %1062 = vsyncadd [#allocation4], %s1061
      %s1064 = sshll.u32 [#allocation10], 4
      %s1065 = int_to_ptr.vmem [resolvable:$true] %s1064
      %1067 = dma.vmem_to_hbm [thread:$0]  %s1065, 128, %s7, [#allocation4]
    $region49: #{tpu_custom_call.1} parent=1 // pred_fallthru
      _
    // Predicated region
    $region50: #{tpu_custom_call.1} parent=1 // pred_check
      _
    $region51: #{tpu_custom_call.1} parent=1 // pred_check_branch
      %1069 = sbr.rel (0) target = $region53
    $region52: #{tpu_custom_call.1} parent=1 // pred_region
      %1070 = dma.done [#allocation4], 128
    $region53: #{tpu_custom_call.1} parent=1 // pred_fallthru
      _
    %1071 = vsyncpa [#allocation3], 1
    %1072 = vsyncpa [#allocation6], 1
    %1073 = vsyncpa [#allocation9], 1
    %1074 = vsyncpa [#allocation4], 1

</llo_original>
